<compile_context>
chip_gen: v7x
topology: tpu7x:2x2x1
jax: 0.10.0
libtpu: 0.0.40
codegen_flags: <defaults>
</compile_context>

<pallas_src>
import functools

import jax
import jax.numpy as jnp
from jax.experimental import pallas as pl
from jax.experimental.pallas import tpu as pltpu

K = 3        # conv kernel size
STRIDE = 2   # conv stride
C1 = 16      # channels after first conv
BN_EPS = 1e-5


def _cdiv(a, b):
    return (a + b - 1) // b


def _conv1_row(x_a, x_b, x_c, w1c, b1c):
    """Conv1d(1->16) + ReLU for one batch row.

    x_a/x_b/x_c: (1, n) taps (time on lanes); w1c: (16, 3); b1c: (16, 1).
    Returns (16, n): lane-dense broadcast FMAs on the VPU.
    """
    a = (w1c[:, 0:1] * x_a + w1c[:, 1:2] * x_b + w1c[:, 2:3] * x_c) + b1c
    return jnp.maximum(a, 0.0)


# ---------------------------------------------------------------------------
# Pass 1: conv1 + ReLU + per-channel partial sum / sum-of-squares per batch tile.
# Fully parallel grid; partial stats are summed in the wrapper.
# ---------------------------------------------------------------------------
def _stats_kernel(x0_ref, x1_ref, x2_ref, x3_ref, w1_ref, b1_ref, stats_ref,
                  *, tb, n_even, n_odd):
    w1c = w1_ref[...]                                   # (16, 3)
    b1c = b1_ref[...]                                   # (16, 1)
    s1 = jnp.zeros((C1, 1), jnp.float32)
    s2 = jnp.zeros((C1, 1), jnp.float32)
    for r in range(tb):
        # h1 at even output positions s=2u: taps x[4u], x[4u+1], x[4u+2]
        he = _conv1_row(x0_ref[r:r + 1, 0:n_even],
                        x1_ref[r:r + 1, 0:n_even],
                        x2_ref[r:r + 1, 0:n_even], w1c, b1c)        # (16, n_even)
        # h1 at odd output positions s=2u+1: taps x[4u+2], x[4u+3], x[4u+4]
        ho = _conv1_row(x2_ref[r:r + 1, 0:n_odd],
                        x3_ref[r:r + 1, 0:n_odd],
                        x0_ref[r:r + 1, 1:n_odd + 1], w1c, b1c)     # (16, n_odd)
        s1 = s1 + jnp.sum(he, axis=1, keepdims=True) + jnp.sum(ho, axis=1, keepdims=True)
        s2 = (s2 + jnp.sum(he * he, axis=1, keepdims=True)
              + jnp.sum(ho * ho, axis=1, keepdims=True))
    stats_ref[:, 0:1] = s1
    stats_ref[:, 1:2] = s2


# ---------------------------------------------------------------------------
# Pass 2: conv1 recomputed (cheap, avoids an HBM round trip of h1), conv2 with
# BN pre-folded into its weights (one (E,48)x(48,L2) MXU matmul per row), ReLU,
# and the global average pool as an in-kernel lane reduction.
# ---------------------------------------------------------------------------
def _encode_kernel(x0_ref, x1_ref, x2_ref, x3_ref, w1_ref, b1_ref, w2_ref, b2_ref,
                   o_ref, *, tb, l2):
    w1c = w1_ref[...]                                   # (16, 3)
    b1c = b1_ref[...]                                   # (16, 1)
    w2f = w2_ref[...]                                   # (E, 48)  BN scale folded in
    b2f = b2_ref[...]                                   # (E, 1)   BN shift folded in
    inv_l2 = 1.0 / float(l2)
    for r in range(tb):
        h1e = _conv1_row(x0_ref[r:r + 1, 0:l2 + 1],
                         x1_ref[r:r + 1, 0:l2 + 1],
                         x2_ref[r:r + 1, 0:l2 + 1], w1c, b1c)       # (16, l2+1) = h1[2t]
        h1o = _conv1_row(x2_ref[r:r + 1, 0:l2],
                         x3_ref[r:r + 1, 0:l2],
                         x0_ref[r:r + 1, 1:l2 + 1], w1c, b1c)       # (16, l2)   = h1[2t+1]
        taps = jnp.concatenate(
            [h1e[:, 0:l2], h1o, h1e[:, 1:l2 + 1]], axis=0)          # (48, l2), row 16k+c
        h2 = jnp.dot(w2f, taps, preferred_element_type=jnp.float32) + b2f
        h2 = jnp.maximum(h2, 0.0)                                   # (E, l2)
        o_ref[:, r:r + 1] = jnp.sum(h2, axis=1, keepdims=True) * inv_l2


@jax.jit
def uswd_fft_encoder(x, w1, b1, gamma, beta, w2, b2):
    """x: (B, L) float32. Returns (B, emb_dim) float32 (training-mode BN)."""
    B, L = x.shape
    E = w2.shape[0]
    L1 = (L - K) // STRIDE + 1
    L2 = (L1 - K) // STRIDE + 1
    assert L1 >= K and L2 >= 1, "input sequence too short"

    n_even = (L1 + 1) // 2            # even conv1 output positions
    n_odd = L1 // 2                   # odd conv1 output positions
    Lq = n_odd + 1                    # polyphase length needed by both passes

    x = x.astype(jnp.float32)

    # ---- batch tiling: ~2048 conv1 positions / step, VMEM guard, >=2 steps when B>=2 --
    tb = max(1, min(32, _cdiv(2048, L1)))
    tb = min(tb, B)
    while tb > 1 and 2 * 4 * tb * Lq * 4 > (6 << 20):   # double-buffered phase blocks
        tb //= 2
    if B >= 2:
        tb = min(tb, (B + 1) // 2)    # keep the parallel grid >= 2 steps (v7x megacore)
    G = _cdiv(B, tb)
    B_pad = G * tb

    # ---- polyphase split of x: stride-4 slices, no gathers, no size expansion ----
    x_pad = jnp.pad(x, ((0, B_pad - B), (0, 4 * Lq - L)))           # 4*Lq >= L always
    phases = [x_pad[:, p::4][:, :Lq].reshape(G, tb, Lq) for p in range(4)]

    w1c = w1[:, 0, :].astype(jnp.float32)                           # (16, 3)
    b1c = b1.astype(jnp.float32).reshape(C1, 1)                     # (16, 1)

    phase_spec = pl.BlockSpec((None, tb, Lq), lambda i: (i, 0, 0))
    w1_spec = pl.BlockSpec((C1, K), lambda i: (0, 0))
    b1_spec = pl.BlockSpec((C1, 1), lambda i: (0, 0))

    need = (2 * 4 * tb * Lq * 4                                     # phases, dbl-buffered
            + 2 * (E * (K * C1 + 1) + C1 * (K + 1)) * 4             # params
            + 2 * max(C1 * 2, E * tb) * 4)                          # outputs
    vmem_limit = int(min(max(2 * need + (4 << 20), 16 << 20), 32 << 20))
    cparams = pltpu.CompilerParams(dimension_semantics=("parallel",),
                                   vmem_limit_bytes=vmem_limit)

    # ---- pass 1: per-tile partial BatchNorm statistics ----
    stats = pl.pallas_call(
        functools.partial(_stats_kernel, tb=tb, n_even=n_even, n_odd=n_odd),
        out_shape=jax.ShapeDtypeStruct((G, C1, 2), jnp.float32),
        grid=(G,),
        in_specs=[phase_spec] * 4 + [w1_spec, b1_spec],
        out_specs=pl.BlockSpec((None, C1, 2), lambda i: (i, 0, 0)),
        compiler_params=cparams,
    )(*phases, w1c, b1c)

    # ---- BN statistics -> affine, folded into conv2 (tiny wrapper-side math) ----
    stats = jnp.sum(stats, axis=0)                                  # (16, 2)
    relu_b1 = jnp.maximum(b1c[:, 0], 0.0)
    pad_cells = float((B_pad - B) * L1)       # zero pad rows contribute relu(b1) per cell
    count = float(B * L1)
    s1 = stats[:, 0] - pad_cells * relu_b1
    s2 = stats[:, 1] - pad_cells * relu_b1 * relu_b1
    mean = s1 / count
    # TODO(synk): E[x^2]-E[x]^2 in f32 can cancel for very large B*L1; a centered second
    # pass would be safer in that regime.
    var = jnp.maximum(s2 / count - mean * mean, 0.0)
    scale = gamma.astype(jnp.float32) * jax.lax.rsqrt(var + BN_EPS)  # (16,)
    shift = beta.astype(jnp.float32) - mean * scale                  # (16,)

    w2_2d = jnp.transpose(w2.astype(jnp.float32), (0, 2, 1)).reshape(E, K * C1)  # col=16k+c
    w2f = w2_2d * jnp.tile(scale, K)[None, :]                        # (E, 48)
    b2f = (b2.astype(jnp.float32) + w2_2d @ jnp.tile(shift, K)).reshape(E, 1)

    # ---- pass 2: conv1 (recomputed) -> conv2(+BN folded) -> ReLU -> global mean ----
    out3d = pl.pallas_call(
        functools.partial(_encode_kernel, tb=tb, l2=L2),
        out_shape=jax.ShapeDtypeStruct((G, E, tb), jnp.float32),
        grid=(G,),
        in_specs=[phase_spec] * 4 + [
            w1_spec, b1_spec,
            pl.BlockSpec((E, K * C1), lambda i: (0, 0)),
            pl.BlockSpec((E, 1), lambda i: (0, 0)),
        ],
        out_specs=pl.BlockSpec((None, E, tb), lambda i: (i, 0, 0)),
        compiler_params=cparams,
    )(*phases, w1c, b1c, w2f, b2f)

    out = jnp.transpose(out3d, (0, 2, 1)).reshape(B_pad, E)
    return out[:B]


def _reference(x, w1, b1, gamma, beta, w2, b2):
    """Pure-JAX NCW reference mirroring the PyTorch forward (training-mode BN)."""
    h = x[:, None, :]                                                   # (B, 1, L)
    h = jax.lax.conv_general_dilated(h, w1, (STRIDE,), "VALID",
                                     dimension_numbers=("NCH", "OIH", "NCH"))
    h = jnp.maximum(h + b1[None, :, None], 0.0)
    mean = jnp.mean(h, axis=(0, 2), keepdims=True)
    var = jnp.var(h, axis=(0, 2), keepdims=True)
    h = (h - mean) / jnp.sqrt(var + BN_EPS) * gamma[None, :, None] + beta[None, :, None]
    h = jax.lax.conv_general_dilated(h, w2, (STRIDE,), "VALID",
                                     dimension_numbers=("NCH", "OIH", "NCH"))
    h = jnp.maximum(h + b2[None, :, None], 0.0)
    return jnp.mean(h, axis=-1)                                         # (B, E)


if __name__ == "__main__":
    B, L, EMB = 2, 64, 32

    key = jax.random.PRNGKey(0)
    k1, k2, k3, k4, kx = jax.random.split(key, 5)

    # Deterministic parameter init (same shapes as the PyTorch module's __init__).
    bnd1 = 1.0 / jnp.sqrt(1.0 * K)
    w1 = jax.random.uniform(k1, (C1, 1, K), jnp.float32, -bnd1, bnd1)
    b1 = jax.random.uniform(k2, (C1,), jnp.float32, -bnd1, bnd1)
    gamma = jnp.ones((C1,), jnp.float32)   # BatchNorm1d default weight
    beta = jnp.zeros((C1,), jnp.float32)   # BatchNorm1d default bias
    bnd2 = 1.0 / jnp.sqrt(float(C1 * K))
    w2 = jax.random.uniform(k3, (EMB, C1, K), jnp.float32, -bnd2, bnd2)
    b2 = jax.random.uniform(k4, (EMB,), jnp.float32, -bnd2, bnd2)

    x = jax.random.normal(kx, (B, L), jnp.float32)

    out = uswd_fft_encoder(x, w1, b1, gamma, beta, w2, b2)
    out = jax.block_until_ready(out)

    ref = jax.block_until_ready(_reference(x, w1, b1, gamma, beta, w2, b2))
    assert out.shape == (B, EMB), out.shape
    assert jnp.allclose(out, ref, atol=1e-4, rtol=1e-4), float(jnp.max(jnp.abs(out - ref)))

    print("KERNEL_OK")
</pallas_src>

<mosaic_0001>
module attributes {stable_mosaic.version = 11 : i64} {
  func.func @_stats_kernel(%arg0: i32, %arg1: memref<1x1x16xf32, #tpu.memory_space<vmem>>, %arg2: memref<1x1x16xf32, #tpu.memory_space<vmem>>, %arg3: memref<1x1x16xf32, #tpu.memory_space<vmem>>, %arg4: memref<1x1x16xf32, #tpu.memory_space<vmem>>, %arg5: memref<16x3xf32, #tpu.memory_space<vmem>>, %arg6: memref<16x1xf32, #tpu.memory_space<vmem>>, %arg7: memref<1x16x2xf32, #tpu.memory_space<vmem>>) attributes {dimension_semantics = [#tpu.dimension_semantics<parallel>], iteration_bounds = array<i64: 2>, scalar_prefetch = 0 : i64, scratch_operands = 0 : i64, tpu.core_type = #tpu.core_type<tc>, window_params = [{transform_indices = @transform_0, window_bounds = array<i64: 1, 1, 16>}, {transform_indices = @transform_1, window_bounds = array<i64: 1, 1, 16>}, {transform_indices = @transform_2, window_bounds = array<i64: 1, 1, 16>}, {transform_indices = @transform_3, window_bounds = array<i64: 1, 1, 16>}, {pipeline_mode = #tpu.pipeline_mode<synchronous>, transform_indices = @transform_4, window_bounds = array<i64: 16, 3>}, {pipeline_mode = #tpu.pipeline_mode<synchronous>, transform_indices = @transform_5, window_bounds = array<i64: 16, 1>}, {transform_indices = @transform_6, window_bounds = array<i64: 1, 16, 2>}]} {
    %c0 = arith.constant 0 : index
    %c0_0 = arith.constant 0 : index
    %0 = vector.load %arg5[%c0, %c0_0] : memref<16x3xf32, #tpu.memory_space<vmem>>, vector<16x3xf32>
    %c0_1 = arith.constant 0 : index
    %c0_2 = arith.constant 0 : index
    %1 = vector.load %arg6[%c0_1, %c0_2] : memref<16x1xf32, #tpu.memory_space<vmem>>, vector<16x1xf32>
    %cst = arith.constant 0.000000e+00 : f32
    %2 = vector.broadcast %cst : f32 to vector<16x1xf32>
    %cst_3 = arith.constant 0.000000e+00 : f32
    %3 = vector.broadcast %cst_3 : f32 to vector<16x1xf32>
    %c0_4 = arith.constant 0 : index
    %c0_5 = arith.constant 0 : index
    %c0_6 = arith.constant 0 : index
    %4 = vector.load %arg1[%c0_4, %c0_5, %c0_6] : memref<1x1x16xf32, #tpu.memory_space<vmem>>, vector<1x1x16xf32>
    %5 = vector.shape_cast %4 : vector<1x1x16xf32> to vector<1x16xf32>
    %c0_7 = arith.constant 0 : index
    %c0_8 = arith.constant 0 : index
    %c0_9 = arith.constant 0 : index
    %6 = vector.load %arg2[%c0_7, %c0_8, %c0_9] : memref<1x1x16xf32, #tpu.memory_space<vmem>>, vector<1x1x16xf32>
    %7 = vector.shape_cast %6 : vector<1x1x16xf32> to vector<1x16xf32>
    %c0_10 = arith.constant 0 : index
    %c0_11 = arith.constant 0 : index
    %c0_12 = arith.constant 0 : index
    %8 = vector.load %arg3[%c0_10, %c0_11, %c0_12] : memref<1x1x16xf32, #tpu.memory_space<vmem>>, vector<1x1x16xf32>
    %9 = vector.shape_cast %8 : vector<1x1x16xf32> to vector<1x16xf32>
    %10 = vector.extract_strided_slice %0 {offsets = [0, 0], sizes = [16, 1], strides = [1, 1]} : vector<16x3xf32> to vector<16x1xf32>
    %11 = vector.broadcast %10 : vector<16x1xf32> to vector<16x16xf32>
    %12 = vector.broadcast %5 : vector<1x16xf32> to vector<16x16xf32>
    %13 = arith.mulf %11, %12 : vector<16x16xf32>
    %14 = vector.extract_strided_slice %0 {offsets = [0, 1], sizes = [16, 1], strides = [1, 1]} : vector<16x3xf32> to vector<16x1xf32>
    %15 = vector.broadcast %14 : vector<16x1xf32> to vector<16x16xf32>
    %16 = vector.broadcast %7 : vector<1x16xf32> to vector<16x16xf32>
    %17 = arith.mulf %15, %16 : vector<16x16xf32>
    %18 = arith.addf %13, %17 : vector<16x16xf32>
    %19 = vector.extract_strided_slice %0 {offsets = [0, 2], sizes = [16, 1], strides = [1, 1]} : vector<16x3xf32> to vector<16x1xf32>
    %20 = vector.broadcast %19 : vector<16x1xf32> to vector<16x16xf32>
    %21 = vector.broadcast %9 : vector<1x16xf32> to vector<16x16xf32>
    %22 = arith.mulf %20, %21 : vector<16x16xf32>
    %23 = arith.addf %18, %22 : vector<16x16xf32>
    %24 = vector.broadcast %1 : vector<16x1xf32> to vector<16x16xf32>
    %25 = arith.addf %23, %24 : vector<16x16xf32>
    %cst_13 = arith.constant 0.000000e+00 : f32
    %26 = vector.broadcast %cst_13 : f32 to vector<16x16xf32>
    %27 = arith.maximumf %25, %26 : vector<16x16xf32>
    %c0_14 = arith.constant 0 : index
    %c0_15 = arith.constant 0 : index
    %c0_16 = arith.constant 0 : index
    %28 = vector.load %arg3[%c0_14, %c0_15, %c0_16] : memref<1x1x16xf32, #tpu.memory_space<vmem>>, vector<1x1x15xf32>
    %29 = vector.shape_cast %28 : vector<1x1x15xf32> to vector<1x15xf32>
    %c0_17 = arith.constant 0 : index
    %c0_18 = arith.constant 0 : index
    %c0_19 = arith.constant 0 : index
    %30 = vector.load %arg4[%c0_17, %c0_18, %c0_19] : memref<1x1x16xf32, #tpu.memory_space<vmem>>, vector<1x1x15xf32>
    %31 = vector.shape_cast %30 : vector<1x1x15xf32> to vector<1x15xf32>
    %c0_20 = arith.constant 0 : index
    %c0_21 = arith.constant 0 : index
    %c1 = arith.constant 1 : index
    %32 = vector.load %arg1[%c0_20, %c0_21, %c1] : memref<1x1x16xf32, #tpu.memory_space<vmem>>, vector<1x1x15xf32>
    %33 = vector.shape_cast %32 : vector<1x1x15xf32> to vector<1x15xf32>
    %34 = vector.extract_strided_slice %0 {offsets = [0, 0], sizes = [16, 1], strides = [1, 1]} : vector<16x3xf32> to vector<16x1xf32>
    %35 = vector.broadcast %34 : vector<16x1xf32> to vector<16x15xf32>
    %36 = vector.broadcast %29 : vector<1x15xf32> to vector<16x15xf32>
    %37 = arith.mulf %35, %36 : vector<16x15xf32>
    %38 = vector.extract_strided_slice %0 {offsets = [0, 1], sizes = [16, 1], strides = [1, 1]} : vector<16x3xf32> to vector<16x1xf32>
    %39 = vector.broadcast %38 : vector<16x1xf32> to vector<16x15xf32>
    %40 = vector.broadcast %31 : vector<1x15xf32> to vector<16x15xf32>
    %41 = arith.mulf %39, %40 : vector<16x15xf32>
    %42 = arith.addf %37, %41 : vector<16x15xf32>
    %43 = vector.extract_strided_slice %0 {offsets = [0, 2], sizes = [16, 1], strides = [1, 1]} : vector<16x3xf32> to vector<16x1xf32>
    %44 = vector.broadcast %43 : vector<16x1xf32> to vector<16x15xf32>
    %45 = vector.broadcast %33 : vector<1x15xf32> to vector<16x15xf32>
    %46 = arith.mulf %44, %45 : vector<16x15xf32>
    %47 = arith.addf %42, %46 : vector<16x15xf32>
    %48 = vector.broadcast %1 : vector<16x1xf32> to vector<16x15xf32>
    %49 = arith.addf %47, %48 : vector<16x15xf32>
    %cst_22 = arith.constant 0.000000e+00 : f32
    %50 = vector.broadcast %cst_22 : f32 to vector<16x15xf32>
    %51 = arith.maximumf %49, %50 : vector<16x15xf32>
    %cst_23 = arith.constant dense<0.000000e+00> : vector<16xf32>
    %52 = vector.multi_reduction <add>, %27, %cst_23 [1] : vector<16x16xf32> to vector<16xf32>
    %53 = vector.shape_cast %52 : vector<16xf32> to vector<16x1xf32>
    %54 = arith.addf %2, %53 : vector<16x1xf32>
    %cst_24 = arith.constant dense<0.000000e+00> : vector<16xf32>
    %55 = vector.multi_reduction <add>, %51, %cst_24 [1] : vector<16x15xf32> to vector<16xf32>
    %56 = vector.shape_cast %55 : vector<16xf32> to vector<16x1xf32>
    %57 = arith.addf %54, %56 : vector<16x1xf32>
    %58 = arith.mulf %27, %27 : vector<16x16xf32>
    %cst_25 = arith.constant dense<0.000000e+00> : vector<16xf32>
    %59 = vector.multi_reduction <add>, %58, %cst_25 [1] : vector<16x16xf32> to vector<16xf32>
    %60 = vector.shape_cast %59 : vector<16xf32> to vector<16x1xf32>
    %61 = arith.addf %3, %60 : vector<16x1xf32>
    %62 = arith.mulf %51, %51 : vector<16x15xf32>
    %cst_26 = arith.constant dense<0.000000e+00> : vector<16xf32>
    %63 = vector.multi_reduction <add>, %62, %cst_26 [1] : vector<16x15xf32> to vector<16xf32>
    %64 = vector.shape_cast %63 : vector<16xf32> to vector<16x1xf32>
    %65 = arith.addf %61, %64 : vector<16x1xf32>
    %c0_27 = arith.constant 0 : index
    %c0_28 = arith.constant 0 : index
    %c0_29 = arith.constant 0 : index
    %66 = vector.load %arg7[%c0_27, %c0_28, %c0_29] : memref<1x16x2xf32, #tpu.memory_space<vmem>>, vector<1x16x1xf32>
    %67 = vector.shape_cast %66 : vector<1x16x1xf32> to vector<16x1xf32>
    %68 = vector.shape_cast %57 : vector<16x1xf32> to vector<1x16x1xf32>
    tpu.vector_store %arg7[%c0_27, %c0_28, %c0_29], %68 {strides = array<i32>} : memref<1x16x2xf32, #tpu.memory_space<vmem>>, vector<1x16x1xf32>,
    %c0_30 = arith.constant 0 : index
    %c0_31 = arith.constant 0 : index
    %c1_32 = arith.constant 1 : index
    %69 = vector.load %arg7[%c0_30, %c0_31, %c1_32] : memref<1x16x2xf32, #tpu.memory_space<vmem>>, vector<1x16x1xf32>
    %70 = vector.shape_cast %69 : vector<1x16x1xf32> to vector<16x1xf32>
    %71 = vector.shape_cast %65 : vector<16x1xf32> to vector<1x16x1xf32>
    tpu.vector_store %arg7[%c0_30, %c0_31, %c1_32], %71 {strides = array<i32>} : memref<1x16x2xf32, #tpu.memory_space<vmem>>, vector<1x16x1xf32>,
    return
  }
  func.func @transform_0(%arg0: i32) -> (i32, i32, i32) {
    %c0_i32 = arith.constant 0 : i32
    %c0_i32_0 = arith.constant 0 : i32
    %c0_i32_1 = arith.constant 0 : i32
    return %arg0, %c0_i32, %c0_i32_0 : i32, i32, i32
  }
  func.func @transform_1(%arg0: i32) -> (i32, i32, i32) {
    %c0_i32 = arith.constant 0 : i32
    %c0_i32_0 = arith.constant 0 : i32
    %c0_i32_1 = arith.constant 0 : i32
    return %arg0, %c0_i32, %c0_i32_0 : i32, i32, i32
  }
  func.func @transform_2(%arg0: i32) -> (i32, i32, i32) {
    %c0_i32 = arith.constant 0 : i32
    %c0_i32_0 = arith.constant 0 : i32
    %c0_i32_1 = arith.constant 0 : i32
    return %arg0, %c0_i32, %c0_i32_0 : i32, i32, i32
  }
  func.func @transform_3(%arg0: i32) -> (i32, i32, i32) {
    %c0_i32 = arith.constant 0 : i32
    %c0_i32_0 = arith.constant 0 : i32
    %c0_i32_1 = arith.constant 0 : i32
    return %arg0, %c0_i32, %c0_i32_0 : i32, i32, i32
  }
  func.func @transform_4(%arg0: i32) -> (i32, i32) {
    %c0_i32 = arith.constant 0 : i32
    %c0_i32_0 = arith.constant 0 : i32
    %c0_i32_1 = arith.constant 0 : i32
    return %c0_i32, %c0_i32_0 : i32, i32
  }
  func.func @transform_5(%arg0: i32) -> (i32, i32) {
    %c0_i32 = arith.constant 0 : i32
    %c0_i32_0 = arith.constant 0 : i32
    %c0_i32_1 = arith.constant 0 : i32
    return %c0_i32, %c0_i32_0 : i32, i32
  }
  func.func @transform_6(%arg0: i32) -> (i32, i32, i32) {
    %c0_i32 = arith.constant 0 : i32
    %c0_i32_0 = arith.constant 0 : i32
    %c0_i32_1 = arith.constant 0 : i32
    return %arg0, %c0_i32, %c0_i32_0 : i32, i32, i32
  }
}

module attributes {stable_mosaic.version = 11 : i64} {
  func.func @_encode_kernel(%arg0: i32, %arg1: memref<1x1x16xf32, #tpu.memory_space<vmem>>, %arg2: memref<1x1x16xf32, #tpu.memory_space<vmem>>, %arg3: memref<1x1x16xf32, #tpu.memory_space<vmem>>, %arg4: memref<1x1x16xf32, #tpu.memory_space<vmem>>, %arg5: memref<16x3xf32, #tpu.memory_space<vmem>>, %arg6: memref<16x1xf32, #tpu.memory_space<vmem>>, %arg7: memref<32x48xf32, #tpu.memory_space<vmem>>, %arg8: memref<32x1xf32, #tpu.memory_space<vmem>>, %arg9: memref<1x32x1xf32, #tpu.memory_space<vmem>>) attributes {dimension_semantics = [#tpu.dimension_semantics<parallel>], iteration_bounds = array<i64: 2>, scalar_prefetch = 0 : i64, scratch_operands = 0 : i64, tpu.core_type = #tpu.core_type<tc>, window_params = [{transform_indices = @transform_0, window_bounds = array<i64: 1, 1, 16>}, {transform_indices = @transform_1, window_bounds = array<i64: 1, 1, 16>}, {transform_indices = @transform_2, window_bounds = array<i64: 1, 1, 16>}, {transform_indices = @transform_3, window_bounds = array<i64: 1, 1, 16>}, {pipeline_mode = #tpu.pipeline_mode<synchronous>, transform_indices = @transform_4, window_bounds = array<i64: 16, 3>}, {pipeline_mode = #tpu.pipeline_mode<synchronous>, transform_indices = @transform_5, window_bounds = array<i64: 16, 1>}, {pipeline_mode = #tpu.pipeline_mode<synchronous>, transform_indices = @transform_6, window_bounds = array<i64: 32, 48>}, {pipeline_mode = #tpu.pipeline_mode<synchronous>, transform_indices = @transform_7, window_bounds = array<i64: 32, 1>}, {transform_indices = @transform_8, window_bounds = array<i64: 1, 32, 1>}]} {
    %c0 = arith.constant 0 : index
    %c0_0 = arith.constant 0 : index
    %0 = vector.load %arg5[%c0, %c0_0] : memref<16x3xf32, #tpu.memory_space<vmem>>, vector<16x3xf32>
    %c0_1 = arith.constant 0 : index
    %c0_2 = arith.constant 0 : index
    %1 = vector.load %arg6[%c0_1, %c0_2] : memref<16x1xf32, #tpu.memory_space<vmem>>, vector<16x1xf32>
    %c0_3 = arith.constant 0 : index
    %c0_4 = arith.constant 0 : index
    %2 = vector.load %arg7[%c0_3, %c0_4] : memref<32x48xf32, #tpu.memory_space<vmem>>, vector<32x48xf32>
    %c0_5 = arith.constant 0 : index
    %c0_6 = arith.constant 0 : index
    %3 = vector.load %arg8[%c0_5, %c0_6] : memref<32x1xf32, #tpu.memory_space<vmem>>, vector<32x1xf32>
    %c0_7 = arith.constant 0 : index
    %c0_8 = arith.constant 0 : index
    %c0_9 = arith.constant 0 : index
    %4 = vector.load %arg1[%c0_7, %c0_8, %c0_9] : memref<1x1x16xf32, #tpu.memory_space<vmem>>, vector<1x1x16xf32>
    %5 = vector.shape_cast %4 : vector<1x1x16xf32> to vector<1x16xf32>
    %c0_10 = arith.constant 0 : index
    %c0_11 = arith.constant 0 : index
    %c0_12 = arith.constant 0 : index
    %6 = vector.load %arg2[%c0_10, %c0_11, %c0_12] : memref<1x1x16xf32, #tpu.memory_space<vmem>>, vector<1x1x16xf32>
    %7 = vector.shape_cast %6 : vector<1x1x16xf32> to vector<1x16xf32>
    %c0_13 = arith.constant 0 : index
    %c0_14 = arith.constant 0 : index
    %c0_15 = arith.constant 0 : index
    %8 = vector.load %arg3[%c0_13, %c0_14, %c0_15] : memref<1x1x16xf32, #tpu.memory_space<vmem>>, vector<1x1x16xf32>
    %9 = vector.shape_cast %8 : vector<1x1x16xf32> to vector<1x16xf32>
    %10 = vector.extract_strided_slice %0 {offsets = [0, 0], sizes = [16, 1], strides = [1, 1]} : vector<16x3xf32> to vector<16x1xf32>
    %11 = vector.broadcast %10 : vector<16x1xf32> to vector<16x16xf32>
    %12 = vector.broadcast %5 : vector<1x16xf32> to vector<16x16xf32>
    %13 = arith.mulf %11, %12 : vector<16x16xf32>
    %14 = vector.extract_strided_slice %0 {offsets = [0, 1], sizes = [16, 1], strides = [1, 1]} : vector<16x3xf32> to vector<16x1xf32>
    %15 = vector.broadcast %14 : vector<16x1xf32> to vector<16x16xf32>
    %16 = vector.broadcast %7 : vector<1x16xf32> to vector<16x16xf32>
    %17 = arith.mulf %15, %16 : vector<16x16xf32>
    %18 = arith.addf %13, %17 : vector<16x16xf32>
    %19 = vector.extract_strided_slice %0 {offsets = [0, 2], sizes = [16, 1], strides = [1, 1]} : vector<16x3xf32> to vector<16x1xf32>
    %20 = vector.broadcast %19 : vector<16x1xf32> to vector<16x16xf32>
    %21 = vector.broadcast %9 : vector<1x16xf32> to vector<16x16xf32>
    %22 = arith.mulf %20, %21 : vector<16x16xf32>
    %23 = arith.addf %18, %22 : vector<16x16xf32>
    %24 = vector.broadcast %1 : vector<16x1xf32> to vector<16x16xf32>
    %25 = arith.addf %23, %24 : vector<16x16xf32>
    %cst = arith.constant 0.000000e+00 : f32
    %26 = vector.broadcast %cst : f32 to vector<16x16xf32>
    %27 = arith.maximumf %25, %26 : vector<16x16xf32>
    %c0_16 = arith.constant 0 : index
    %c0_17 = arith.constant 0 : index
    %c0_18 = arith.constant 0 : index
    %28 = vector.load %arg3[%c0_16, %c0_17, %c0_18] : memref<1x1x16xf32, #tpu.memory_space<vmem>>, vector<1x1x15xf32>
    %29 = vector.shape_cast %28 : vector<1x1x15xf32> to vector<1x15xf32>
    %c0_19 = arith.constant 0 : index
    %c0_20 = arith.constant 0 : index
    %c0_21 = arith.constant 0 : index
    %30 = vector.load %arg4[%c0_19, %c0_20, %c0_21] : memref<1x1x16xf32, #tpu.memory_space<vmem>>, vector<1x1x15xf32>
    %31 = vector.shape_cast %30 : vector<1x1x15xf32> to vector<1x15xf32>
    %c0_22 = arith.constant 0 : index
    %c0_23 = arith.constant 0 : index
    %c1 = arith.constant 1 : index
    %32 = vector.load %arg1[%c0_22, %c0_23, %c1] : memref<1x1x16xf32, #tpu.memory_space<vmem>>, vector<1x1x15xf32>
    %33 = vector.shape_cast %32 : vector<1x1x15xf32> to vector<1x15xf32>
    %34 = vector.extract_strided_slice %0 {offsets = [0, 0], sizes = [16, 1], strides = [1, 1]} : vector<16x3xf32> to vector<16x1xf32>
    %35 = vector.broadcast %34 : vector<16x1xf32> to vector<16x15xf32>
    %36 = vector.broadcast %29 : vector<1x15xf32> to vector<16x15xf32>
    %37 = arith.mulf %35, %36 : vector<16x15xf32>
    %38 = vector.extract_strided_slice %0 {offsets = [0, 1], sizes = [16, 1], strides = [1, 1]} : vector<16x3xf32> to vector<16x1xf32>
    %39 = vector.broadcast %38 : vector<16x1xf32> to vector<16x15xf32>
    %40 = vector.broadcast %31 : vector<1x15xf32> to vector<16x15xf32>
    %41 = arith.mulf %39, %40 : vector<16x15xf32>
    %42 = arith.addf %37, %41 : vector<16x15xf32>
    %43 = vector.extract_strided_slice %0 {offsets = [0, 2], sizes = [16, 1], strides = [1, 1]} : vector<16x3xf32> to vector<16x1xf32>
    %44 = vector.broadcast %43 : vector<16x1xf32> to vector<16x15xf32>
    %45 = vector.broadcast %33 : vector<1x15xf32> to vector<16x15xf32>
    %46 = arith.mulf %44, %45 : vector<16x15xf32>
    %47 = arith.addf %42, %46 : vector<16x15xf32>
    %48 = vector.broadcast %1 : vector<16x1xf32> to vector<16x15xf32>
    %49 = arith.addf %47, %48 : vector<16x15xf32>
    %cst_24 = arith.constant 0.000000e+00 : f32
    %50 = vector.broadcast %cst_24 : f32 to vector<16x15xf32>
    %51 = arith.maximumf %49, %50 : vector<16x15xf32>
    %52 = vector.extract_strided_slice %27 {offsets = [0, 0], sizes = [16, 15], strides = [1, 1]} : vector<16x16xf32> to vector<16x15xf32>
    %53 = vector.extract_strided_slice %27 {offsets = [0, 1], sizes = [16, 15], strides = [1, 1]} : vector<16x16xf32> to vector<16x15xf32>
    %54 = tpu.concatenate %52, %51, %53 in 0 : vector<16x15xf32>, vector<16x15xf32>, vector<16x15xf32> -> vector<48x15xf32>
    %cst_25 = arith.constant dense<0.000000e+00> : vector<32x15xf32>
    %55 = tpu.matmul %2, %54, %cst_25 {dimension_numbers = #tpu.dot_dimension_numbers<[1], [0], [0], [1], [0, 0, 1, 1], [], []>} : vector<32x48xf32>, vector<48x15xf32>, vector<32x15xf32> -> vector<32x15xf32>
    %56 = vector.broadcast %3 : vector<32x1xf32> to vector<32x15xf32>
    %57 = arith.addf %55, %56 : vector<32x15xf32>
    %cst_26 = arith.constant 0.000000e+00 : f32
    %58 = vector.broadcast %cst_26 : f32 to vector<32x15xf32>
    %59 = arith.maximumf %57, %58 : vector<32x15xf32>
    %cst_27 = arith.constant dense<0.000000e+00> : vector<32xf32>
    %60 = vector.multi_reduction <add>, %59, %cst_27 [1] : vector<32x15xf32> to vector<32xf32>
    %61 = vector.shape_cast %60 : vector<32xf32> to vector<32x1xf32>
    %cst_28 = arith.constant 0.0666666701 : f32
    %62 = vector.broadcast %cst_28 : f32 to vector<32x1xf32>
    %63 = arith.mulf %61, %62 : vector<32x1xf32>
    %c0_29 = arith.constant 0 : index
    %c0_30 = arith.constant 0 : index
    %c0_31 = arith.constant 0 : index
    %64 = vector.load %arg9[%c0_29, %c0_30, %c0_31] : memref<1x32x1xf32, #tpu.memory_space<vmem>>, vector<1x32x1xf32>
    %65 = vector.shape_cast %64 : vector<1x32x1xf32> to vector<32x1xf32>
    %66 = vector.shape_cast %63 : vector<32x1xf32> to vector<1x32x1xf32>
    tpu.vector_store %arg9[%c0_29, %c0_30, %c0_31], %66 {strides = array<i32>} : memref<1x32x1xf32, #tpu.memory_space<vmem>>, vector<1x32x1xf32>,
    return
  }
  func.func @transform_0(%arg0: i32) -> (i32, i32, i32) {
    %c0_i32 = arith.constant 0 : i32
    %c0_i32_0 = arith.constant 0 : i32
    %c0_i32_1 = arith.constant 0 : i32
    return %arg0, %c0_i32, %c0_i32_0 : i32, i32, i32
  }
  func.func @transform_1(%arg0: i32) -> (i32, i32, i32) {
    %c0_i32 = arith.constant 0 : i32
    %c0_i32_0 = arith.constant 0 : i32
    %c0_i32_1 = arith.constant 0 : i32
    return %arg0, %c0_i32, %c0_i32_0 : i32, i32, i32
  }
  func.func @transform_2(%arg0: i32) -> (i32, i32, i32) {
    %c0_i32 = arith.constant 0 : i32
    %c0_i32_0 = arith.constant 0 : i32
    %c0_i32_1 = arith.constant 0 : i32
    return %arg0, %c0_i32, %c0_i32_0 : i32, i32, i32
  }
  func.func @transform_3(%arg0: i32) -> (i32, i32, i32) {
    %c0_i32 = arith.constant 0 : i32
    %c0_i32_0 = arith.constant 0 : i32
    %c0_i32_1 = arith.constant 0 : i32
    return %arg0, %c0_i32, %c0_i32_0 : i32, i32, i32
  }
  func.func @transform_4(%arg0: i32) -> (i32, i32) {
    %c0_i32 = arith.constant 0 : i32
    %c0_i32_0 = arith.constant 0 : i32
    %c0_i32_1 = arith.constant 0 : i32
    return %c0_i32, %c0_i32_0 : i32, i32
  }
  func.func @transform_5(%arg0: i32) -> (i32, i32) {
    %c0_i32 = arith.constant 0 : i32
    %c0_i32_0 = arith.constant 0 : i32
    %c0_i32_1 = arith.constant 0 : i32
    return %c0_i32, %c0_i32_0 : i32, i32
  }
  func.func @transform_6(%arg0: i32) -> (i32, i32) {
    %c0_i32 = arith.constant 0 : i32
    %c0_i32_0 = arith.constant 0 : i32
    %c0_i32_1 = arith.constant 0 : i32
    return %c0_i32, %c0_i32_0 : i32, i32
  }
  func.func @transform_7(%arg0: i32) -> (i32, i32) {
    %c0_i32 = arith.constant 0 : i32
    %c0_i32_0 = arith.constant 0 : i32
    %c0_i32_1 = arith.constant 0 : i32
    return %c0_i32, %c0_i32_0 : i32, i32
  }
  func.func @transform_8(%arg0: i32) -> (i32, i32, i32) {
    %c0_i32 = arith.constant 0 : i32
    %c0_i32_0 = arith.constant 0 : i32
    %c0_i32_1 = arith.constant 0 : i32
    return %arg0, %c0_i32, %c0_i32_0 : i32, i32, i32
  }
}

</mosaic_0001>

<llo_original>
// kernel: tile.13
$region0: #{tile.13}
  #allocation0 [shape = 's32[1]{0}', space=sflag, size = 0x4, scoped, tag = 'scoped memory for tile.13']
  %s0 = inlined_call_operand.vmem [shape: f32[16], index: 0, kind: input, shape index: {}]
  %s1 = inlined_call_operand.vmem [shape: f32[3,16], index: 1, kind: output, shape index: {}]
  // Predicated region
  $region2: #{tile.13} parent=0 // pred_check
    _
  $region3: #{tile.13} parent=0 // pred_check_branch
    %3 = sbr.rel (0) target = $region5
  $region4: #{tile.13} parent=0 // pred_region
    _
  $region5: #{tile.13} parent=0 // pred_fallthru
    _
  %v4 = vld [vmem:[%s0] ss:$0 sm:$0xff]
  %5 = vst [vmem:[%s1] sm:$0xf] %v4

// kernel: mul.17
$region0: #{mul.17}
  %s0 = inlined_call_operand.vmem [shape: f32[3,16], index: 0, kind: input, shape index: {}]
  %s1 = inlined_call_operand.vmem [shape: f32[48], index: 1, kind: output, shape index: {}]
  $region1: #{mul.17} parent=0
    #allocation0 [shape = 'u8[4096]{0}', space=vmem, size = 0x1000, scoped, tag = 'scoped mem for output reshape']
    #allocation1 [shape = 'u8[4096]{0}', space=vmem, size = 0x1000, scoped, tag = 'scoped mem for input reshape']
    %s3 = sshllo.u32 0, 4
    %v4 = vld [vmem:[%s0] sm:%s3]
    %5 = vst [vmem:[#allocation1] sm:%s3] %v4
    %v6 = vld [vmem:[#allocation1] sm:$0x1]
    %vm7 = vcmask 130048
    %8 = vst.msk [vmem:[#allocation0] sm:$0x1] %vm7, %v6
    %s9 = scalar_lea.vmem [#allocation1], 2
    %v10 = vld [vmem:[%s9] sm:$0x1]
    %11 = vrot.lane.b32.xlu0 %v10, 32
    %v12 = vpop.permute.xlu0 %11
    %vm13 = vcmask 392448
    %14 = vst.msk [vmem:[#allocation0] sm:$0x1] %vm13, %v12
    %s15 = scalar_lea.vmem [#allocation1], 1
    %v16 = vld [vmem:[%s15] sm:$0x1]
    %17 = vrot.lane.b32.xlu0 %v16, 16
    %v18 = vpop.permute.xlu0 %17
    %vm19 = vcmask 261248
    %20 = vst.msk [vmem:[#allocation0] sm:$0x1] %vm19, %v18
    %s22 = sshllo.u32 0, 1
    %v24 = vld [vmem:[#allocation0] sm:%s22]
    %s25 = sshllo.u32 0, 1
    %26 = vst [vmem:[%s1] sm:%s25] %v24

// kernel: uswd_fft_encoder.2
$region0: #{uswd_fft_encoder.2}
  #allocation0 [shape = 'u32[]', space=smem, size = 0x4, offset = 0x4, fixed_abs, tag = 'smem constant byte address 0x4 - core index']
  #allocation1 [shape = 'u32[144,128]{1,0:T(1,128)}', space=vmem, size = 0x12000, scoped, tag = 'internal scratch']
  %s0 = inlined_call_operand.vmem [shape: f32[2,1,16], index: 0, kind: input, shape index: {}]
  %s1 = inlined_call_operand.vmem [shape: f32[2,1,16], index: 1, kind: input, shape index: {}]
  %s2 = inlined_call_operand.vmem [shape: f32[2,1,16], index: 2, kind: input, shape index: {}]
  %s3 = inlined_call_operand.vmem [shape: f32[2,1,16], index: 3, kind: input, shape index: {}]
  %s4 = inlined_call_operand.vmem [shape: f32[16,3], index: 4, kind: input, shape index: {}]
  %s5 = inlined_call_operand.vmem [shape: f32[16,1], index: 5, kind: input, shape index: {}]
  %s6 = inlined_call_operand.vmem [shape: f32[2,16,2], index: 6, kind: output, shape index: {}]
  %s7 = sld [smem:[#allocation0]]
  $region57: #{uswd_fft_encoder.2} parent=0
    _
  %s9 = ssub.s32 1, %s7
  %s10 = scalar_select 0, %s9, %s7
  loop: start=0, step=1, limit=4
  $region2: #{uswd_fft_encoder.2} parent=0 // loop_pre_header
    _
  $region3: #{uswd_fft_encoder.2} parent=0 // loop_header
    %s12 = sphi 0, %s16
    %p13 = scmp.ge.s32.totalorder %s12, 4
    %s22 = sphi 0, %s24
    %s25 = sphi 0, %s22
    %s26 = sphi 0, %s25
    %s42 = sphi 0, %s26
    %s48 = sphi 0, %s50
    %s51 = sphi 0, %s48
    %s52 = sphi 0, %s51
    %s68 = sphi 0, %s52
    %s74 = sphi 0, %s76
    %s77 = sphi 0, %s74
    %s78 = sphi 0, %s77
    %s94 = sphi 0, %s78
    %s100 = sphi 0, %s102
    %s103 = sphi 0, %s100
    %s104 = sphi 0, %s103
    %s120 = sphi 0, %s104
    %s124 = sphi 0, %s124
    %s126 = sphi 0, %s124
    %s127 = sphi 0, %s126
    %s141 = sphi 0, %s127
    %s145 = sphi 0, %s145
    %s147 = sphi 0, %s145
    %s148 = sphi 0, %s147
    %s162 = sphi 0, %s148
    %s168 = sphi 0, %s170
    %s171 = sphi 0, %s168
    %s172 = sphi 0, %s171
    %s188 = sphi 0, %s172
  $region4: #{uswd_fft_encoder.2} parent=0 // loop_header_branch
    %15 = sbr.rel (%p13) target = $region8
  $region5: #{uswd_fft_encoder.2} parent=0 // loop_body
    %s17 = ssub.s32 %s12, 1
    %s18 = ssub.s32 %s12, 2
    %s19 = sadd.s32 %s12, 1
    %s20 = ssub.s32 %s12, %s19
    %p21 = scmp.eq.s32.totalorder %s20, 0
    %s23 = sadd.s32 %s22, 1
    %s24 = scalar_select %p21, %s22, %s23
    %p27 = pneg %p21
    %p28 = scmp.eq.s32.totalorder %s12, 1
    %p29 = por %p27, %p28
    %p30 = scmp.ne.s32.totalorder %s22, %s25
    %p31 = scmp.eq.s32.totalorder %s12, 0
    %p32 = por %p30, %p31
    %p33 = scmp.ne.s32.totalorder %s22, %s25
    %p34 = scmp.eq.s32.totalorder %s17, 1
    %p35 = por %p33, %p34
    %p36 = scmp.ne.s32.totalorder %s25, %s26
    %p37 = scmp.eq.s32.totalorder %s17, 0
    %p38 = por %p36, %p37
    %p39 = scmp.ne.s32.totalorder %s25, %s26
    %p40 = scmp.eq.s32.totalorder %s18, 1
    %p41 = por %p39, %p40
    %p43 = scmp.ne.s32.totalorder %s26, %s42
    %p44 = scmp.eq.s32.totalorder %s18, 0
    %p45 = por %p43, %p44
    %s46 = ssub.s32 %s12, %s19
    %p47 = scmp.eq.s32.totalorder %s46, 0
    %s49 = sadd.s32 %s48, 1
    %s50 = scalar_select %p47, %s48, %s49
    %p53 = pneg %p47
    %p54 = scmp.eq.s32.totalorder %s12, 1
    %p55 = por %p53, %p54
    %p56 = scmp.ne.s32.totalorder %s48, %s51
    %p57 = scmp.eq.s32.totalorder %s12, 0
    %p58 = por %p56, %p57
    %p59 = scmp.ne.s32.totalorder %s48, %s51
    %p60 = scmp.eq.s32.totalorder %s17, 1
    %p61 = por %p59, %p60
    %p62 = scmp.ne.s32.totalorder %s51, %s52
    %p63 = scmp.eq.s32.totalorder %s17, 0
    %p64 = por %p62, %p63
    %p65 = scmp.ne.s32.totalorder %s51, %s52
    %p66 = scmp.eq.s32.totalorder %s18, 1
    %p67 = por %p65, %p66
    %p69 = scmp.ne.s32.totalorder %s52, %s68
    %p70 = scmp.eq.s32.totalorder %s18, 0
    %p71 = por %p69, %p70
    %s72 = ssub.s32 %s12, %s19
    %p73 = scmp.eq.s32.totalorder %s72, 0
    %s75 = sadd.s32 %s74, 1
    %s76 = scalar_select %p73, %s74, %s75
    %p79 = pneg %p73
    %p80 = scmp.eq.s32.totalorder %s12, 1
    %p81 = por %p79, %p80
    %p82 = scmp.ne.s32.totalorder %s74, %s77
    %p83 = scmp.eq.s32.totalorder %s12, 0
    %p84 = por %p82, %p83
    %p85 = scmp.ne.s32.totalorder %s74, %s77
    %p86 = scmp.eq.s32.totalorder %s17, 1
    %p87 = por %p85, %p86
    %p88 = scmp.ne.s32.totalorder %s77, %s78
    %p89 = scmp.eq.s32.totalorder %s17, 0
    %p90 = por %p88, %p89
    %p91 = scmp.ne.s32.totalorder %s77, %s78
    %p92 = scmp.eq.s32.totalorder %s18, 1
    %p93 = por %p91, %p92
    %p95 = scmp.ne.s32.totalorder %s78, %s94
    %p96 = scmp.eq.s32.totalorder %s18, 0
    %p97 = por %p95, %p96
    %s98 = ssub.s32 %s12, %s19
    %p99 = scmp.eq.s32.totalorder %s98, 0
    %s101 = sadd.s32 %s100, 1
    %s102 = scalar_select %p99, %s100, %s101
    %p105 = pneg %p99
    %p106 = scmp.eq.s32.totalorder %s12, 1
    %p107 = por %p105, %p106
    %p108 = scmp.ne.s32.totalorder %s100, %s103
    %p109 = scmp.eq.s32.totalorder %s12, 0
    %p110 = por %p108, %p109
    %p111 = scmp.ne.s32.totalorder %s100, %s103
    %p112 = scmp.eq.s32.totalorder %s17, 1
    %p113 = por %p111, %p112
    %p114 = scmp.ne.s32.totalorder %s103, %s104
    %p115 = scmp.eq.s32.totalorder %s17, 0
    %p116 = por %p114, %p115
    %p117 = scmp.ne.s32.totalorder %s103, %s104
    %p118 = scmp.eq.s32.totalorder %s18, 1
    %p119 = por %p117, %p118
    %p121 = scmp.ne.s32.totalorder %s104, %s120
    %p122 = scmp.eq.s32.totalorder %s18, 0
    %p123 = por %p121, %p122
    %s125 = sadd.s32 %s124, 1
    %p128 = scmp.eq.s32.totalorder %s12, 1
    %p129 = scmp.ne.s32.totalorder %s124, %s126
    %p130 = scmp.eq.s32.totalorder %s12, 0
    %p131 = por %p129, %p130
    %p132 = scmp.ne.s32.totalorder %s124, %s126
    %p133 = scmp.eq.s32.totalorder %s17, 1
    %p134 = por %p132, %p133
    %p135 = scmp.ne.s32.totalorder %s126, %s127
    %p136 = scmp.eq.s32.totalorder %s17, 0
    %p137 = por %p135, %p136
    %p138 = scmp.ne.s32.totalorder %s126, %s127
    %p139 = scmp.eq.s32.totalorder %s18, 1
    %p140 = por %p138, %p139
    %p142 = scmp.ne.s32.totalorder %s127, %s141
    %p143 = scmp.eq.s32.totalorder %s18, 0
    %p144 = por %p142, %p143
    %s146 = sadd.s32 %s145, 1
    %p149 = scmp.eq.s32.totalorder %s12, 1
    %p150 = scmp.ne.s32.totalorder %s145, %s147
    %p151 = scmp.eq.s32.totalorder %s12, 0
    %p152 = por %p150, %p151
    %p153 = scmp.ne.s32.totalorder %s145, %s147
    %p154 = scmp.eq.s32.totalorder %s17, 1
    %p155 = por %p153, %p154
    %p156 = scmp.ne.s32.totalorder %s147, %s148
    %p157 = scmp.eq.s32.totalorder %s17, 0
    %p158 = por %p156, %p157
    %p159 = scmp.ne.s32.totalorder %s147, %s148
    %p160 = scmp.eq.s32.totalorder %s18, 1
    %p161 = por %p159, %p160
    %p163 = scmp.ne.s32.totalorder %s148, %s162
    %p164 = scmp.eq.s32.totalorder %s18, 0
    %p165 = por %p163, %p164
    %s166 = ssub.s32 %s12, %s19
    %p167 = scmp.eq.s32.totalorder %s166, 0
    %s169 = sadd.s32 %s168, 1
    %s170 = scalar_select %p167, %s168, %s169
    %p173 = pneg %p167
    %p174 = scmp.eq.s32.totalorder %s12, 1
    %p175 = por %p173, %p174
    %p176 = scmp.ne.s32.totalorder %s168, %s171
    %p177 = scmp.eq.s32.totalorder %s12, 0
    %p178 = por %p176, %p177
    %p179 = scmp.ne.s32.totalorder %s168, %s171
    %p180 = scmp.eq.s32.totalorder %s17, 1
    %p181 = por %p179, %p180
    %p182 = scmp.ne.s32.totalorder %s171, %s172
    %p183 = scmp.eq.s32.totalorder %s17, 0
    %p184 = por %p182, %p183
    %p185 = scmp.ne.s32.totalorder %s171, %s172
    %p186 = scmp.eq.s32.totalorder %s18, 1
    %p187 = por %p185, %p186
    %p189 = scmp.ne.s32.totalorder %s172, %s188
    %p190 = scmp.eq.s32.totalorder %s18, 0
    %p191 = por %p189, %p190
    %p192 = scmp.le.s32.totalorder 1, %s12
    %p193 = scmp.lt.s32.totalorder %s12, 3
    %p194 = pnand %p192, %p193
    %p195 = pneg %p194
    // Predicated region
    $region9: #{uswd_fft_encoder.2} parent=5 // pred_check
      _
    $region10: #{uswd_fft_encoder.2} parent=5 // pred_check_branch
      %197 = sbr.rel (%p194) target = $region12
    $region11: #{uswd_fft_encoder.2} parent=5 // pred_region
      %s198 = ssub.s32 %s12, 1
      // Predicated region
      $region13: #{uswd_fft_encoder.2} parent=11 // pred_check
        %p199 = pneg %p137
      $region14: #{uswd_fft_encoder.2} parent=11 // pred_check_branch
        %201 = sbr.rel (%p199) target = $region16
      $region15: #{uswd_fft_encoder.2} parent=11 // pred_region
        _
      $region16: #{uswd_fft_encoder.2} parent=11 // pred_fallthru
        _
      // Predicated region
      $region17: #{uswd_fft_encoder.2} parent=11 // pred_check
        %p202 = pneg %p158
      $region18: #{uswd_fft_encoder.2} parent=11 // pred_check_branch
        %204 = sbr.rel (%p202) target = $region20
      $region19: #{uswd_fft_encoder.2} parent=11 // pred_region
        _
      $region20: #{uswd_fft_encoder.2} parent=11 // pred_fallthru
        _
    $region12: #{uswd_fft_encoder.2} parent=5 // pred_fallthru
      _
    %p205 = scmp.lt.s32.totalorder %s12, 2
    // Predicated region
    $region21: #{uswd_fft_encoder.2} parent=5 // pred_check
      %p206 = pneg %p205
    $region22: #{uswd_fft_encoder.2} parent=5 // pred_check_branch
      %208 = sbr.rel (%p206) target = $region24
    $region23: #{uswd_fft_encoder.2} parent=5 // pred_region
      // Predicated region
      $region25: #{uswd_fft_encoder.2} parent=23 // pred_check
        %p209 = pneg %p32
      $region26: #{uswd_fft_encoder.2} parent=23 // pred_check_branch
        %211 = sbr.rel (%p209) target = $region28
      $region27: #{uswd_fft_encoder.2} parent=23 // pred_region
        %p212 = scmp.lt.s32.totalorder %s12, 1
        %s213 = scalar_select %p212, %s12, 1
        %s214 = scalar_lea.vmem %s0, %s213
      $region28: #{uswd_fft_encoder.2} parent=23 // pred_fallthru
        _
      // Predicated region
      $region29: #{uswd_fft_encoder.2} parent=23 // pred_check
        %p215 = pneg %p58
      $region30: #{uswd_fft_encoder.2} parent=23 // pred_check_branch
        %217 = sbr.rel (%p215) target = $region32
      $region31: #{uswd_fft_encoder.2} parent=23 // pred_region
        %p218 = scmp.lt.s32.totalorder %s12, 1
        %s219 = scalar_select %p218, %s12, 1
        %s220 = scalar_lea.vmem %s1, %s219
      $region32: #{uswd_fft_encoder.2} parent=23 // pred_fallthru
        _
      // Predicated region
      $region33: #{uswd_fft_encoder.2} parent=23 // pred_check
        %p221 = pneg %p84
      $region34: #{uswd_fft_encoder.2} parent=23 // pred_check_branch
        %223 = sbr.rel (%p221) target = $region36
      $region35: #{uswd_fft_encoder.2} parent=23 // pred_region
        %p224 = scmp.lt.s32.totalorder %s12, 1
        %s225 = scalar_select %p224, %s12, 1
        %s226 = scalar_lea.vmem %s2, %s225
      $region36: #{uswd_fft_encoder.2} parent=23 // pred_fallthru
        _
      // Predicated region
      $region37: #{uswd_fft_encoder.2} parent=23 // pred_check
        %p227 = pneg %p110
      $region38: #{uswd_fft_encoder.2} parent=23 // pred_check_branch
        %229 = sbr.rel (%p227) target = $region40
      $region39: #{uswd_fft_encoder.2} parent=23 // pred_region
        %p230 = scmp.lt.s32.totalorder %s12, 1
        %s231 = scalar_select %p230, %s12, 1
        %s232 = scalar_lea.vmem %s3, %s231
      $region40: #{uswd_fft_encoder.2} parent=23 // pred_fallthru
        _
    $region24: #{uswd_fft_encoder.2} parent=5 // pred_fallthru
      _
    %p233 = scmp.le.s32.totalorder 1, %s12
    %p234 = scmp.lt.s32.totalorder %s12, 3
    %p235 = pnand %p233, %p234
    %p236 = pneg %p235
    // Predicated region
    $region41: #{uswd_fft_encoder.2} parent=5 // pred_check
      _
    $region42: #{uswd_fft_encoder.2} parent=5 // pred_check_branch
      %238 = sbr.rel (%p235) target = $region44
    $region43: #{uswd_fft_encoder.2} parent=5 // pred_region
      %s239 = ssub.s32 %s12, 1
      %p240 = scmp.lt.s32.totalorder %s17, 1
      %s241 = scalar_select %p240, %s17, 1
      %s242 = scalar_lea.vmem %s0, %s241
      %p243 = pneg %p38
      %p244 = pneg %p35
      %p245 = scmp.lt.s32.totalorder %s17, 1
      %s246 = scalar_select %p245, %s17, 1
      %s247 = scalar_lea.vmem %s1, %s246
      %p248 = pneg %p64
      %p249 = pneg %p61
      %p250 = scmp.lt.s32.totalorder %s17, 1
      %s251 = scalar_select %p250, %s17, 1
      %s252 = scalar_lea.vmem %s2, %s251
      %p253 = pneg %p90
      %p254 = pneg %p87
      %p255 = scmp.lt.s32.totalorder %s17, 1
      %s256 = scalar_select %p255, %s17, 1
      %s257 = scalar_lea.vmem %s3, %s256
      %p258 = pneg %p116
      %p259 = pneg %p113
      %p260 = pneg %p137
      %p261 = pneg %p134
      %p262 = pneg %p158
      %p263 = pneg %p155
      %p264 = pneg %p184
      %p265 = pneg %p181
      %p266 = scmp.lt.s32.totalorder %s17, 1
      %s267 = scalar_select %p266, %s17, 1
      %s268 = smul.addr %s267, 2
      %s269 = smul.addr %s268, 8
      %s270 = scalar_lea.vmem %s6, %s269
      %p271 = scmp.lt.s32.totalorder %s17, 1
      %s272 = scalar_select %p271, %s17, 1
      %s273 = scalar_lea.vmem %s0, %s272
      %p274 = scmp.lt.s32.totalorder %s17, 1
      %s275 = scalar_select %p274, %s17, 1
      %s276 = scalar_lea.vmem %s1, %s275
      %p277 = scmp.lt.s32.totalorder %s17, 1
      %s278 = scalar_select %p277, %s17, 1
      %s279 = scalar_lea.vmem %s2, %s278
      %p280 = scmp.lt.s32.totalorder %s17, 1
      %s281 = scalar_select %p280, %s17, 1
      %s282 = scalar_lea.vmem %s3, %s281
      %p283 = scmp.lt.s32.totalorder %s17, 1
      %s284 = scalar_select %p283, %s17, 1
      %s285 = smul.addr %s284, 2
      %s286 = smul.addr %s285, 8
      %s287 = scalar_lea.vmem %s6, %s286
      %v288 = vld [vmem:[%s4] sm:$0xff]
      %v289 = vld [vmem:[%s4 + $0x8] sm:$0xff]
      %v290 = vld [vmem:[%s5] sm:$0xff]
      %v291 = vld [vmem:[%s5 + $0x8] sm:$0xff]
      %v292 = vld [vmem:[%s273] sm:$0x1]
      %v293 = vld [vmem:[%s276] sm:$0x1]
      %v294 = vld [vmem:[%s279] sm:$0x1]
      %296 = vset.pattern.permute.xlu0 0
      %297 = vperm.xlu0 %296, %v288
      %v298 = vpop.permute.xlu0 %297
      %301 = vset.pattern.permute.xlu0 0
      %302 = vperm.xlu0 %301, %v289
      %v303 = vpop.permute.xlu0 %302
      %v306 = vlaneseq
      %v307 = vshrl.u32 %v306, 7
      %v308 = vsub.s32 0, %v307
      %v309 = vrot.slane %v292, %v308
      %v311 = vmul.f32 %v298, %v309
      %v312 = vmul.f32 %v303, %v309
      %313 = vset.pattern.permute.xlu0 1
      %314 = vperm.xlu0 %313, %v288
      %v315 = vpop.permute.xlu0 %314
      %317 = vset.pattern.permute.xlu0 1
      %318 = vperm.xlu0 %317, %v289
      %v319 = vpop.permute.xlu0 %318
      %v322 = vlaneseq
      %v323 = vshrl.u32 %v322, 7
      %v324 = vsub.s32 0, %v323
      %v325 = vrot.slane %v293, %v324
      %v327 = vmul.f32 %v315, %v325
      %v328 = vmul.f32 %v319, %v325
      %v329 = vadd.f32 %v311, %v327
      %v330 = vadd.f32 %v312, %v328
      %331 = vset.pattern.permute.xlu0 2
      %332 = vperm.xlu0 %331, %v288
      %v333 = vpop.permute.xlu0 %332
      %335 = vset.pattern.permute.xlu0 2
      %336 = vperm.xlu0 %335, %v289
      %v337 = vpop.permute.xlu0 %336
      %v340 = vlaneseq
      %v341 = vshrl.u32 %v340, 7
      %v342 = vsub.s32 0, %v341
      %v343 = vrot.slane %v294, %v342
      %v345 = vmul.f32 %v333, %v343
      %v346 = vmul.f32 %v337, %v343
      %v347 = vadd.f32 %v329, %v345
      %v348 = vadd.f32 %v330, %v346
      %350 = vset.pattern.permute.xlu0 0
      %351 = vperm.xlu0 %350, %v290
      %v352 = vpop.permute.xlu0 %351
      %355 = vset.pattern.permute.xlu0 0
      %356 = vperm.xlu0 %355, %v291
      %v357 = vpop.permute.xlu0 %356
      %v359 = vadd.f32 %v347, %v352
      %v360 = vadd.f32 %v348, %v357
      %v361 = vmax.f32 %v359, 0.0
      %v362 = vmax.f32 %v360, 0.0
      %v363 = vld [vmem:[%s282] sm:$0x1]
      %v364 = vmul.f32 %v298, %v343
      %v365 = vmul.f32 %v303, %v343
      %v367 = vlaneseq
      %v368 = vshrl.u32 %v367, 7
      %v369 = vsub.s32 0, %v368
      %v370 = vrot.slane %v363, %v369
      %v372 = vmul.f32 %v315, %v370
      %v373 = vmul.f32 %v319, %v370
      %v374 = vadd.f32 %v364, %v372
      %v375 = vadd.f32 %v365, %v373
      %v376 = vmul.f32 %v333, %v309
      %v377 = vmul.f32 %v337, %v309
      %380 = vrot.lane.b32.xlu0 %v376, 127
      %v381 = vpop.permute.xlu0 %380
      %382 = vrot.lane.b32.xlu0 %v377, 127
      %v383 = vpop.permute.xlu0 %382
      %v386 = vadd.f32 %v374, %v381
      %v387 = vadd.f32 %v375, %v383
      %v388 = vadd.f32 %v386, %v352
      %v389 = vadd.f32 %v387, %v357
      %v390 = vmax.f32 %v388, 0.0
      %v391 = vmax.f32 %v389, 0.0
      %vm392 = vcmask 130048
      %v393 = vsel %vm392, %v361, 0.0
      %394 = vadd.xlane.f32.xlu0 %v393
      %v395 = vpop.xlane.xlu0 %394
      %v396 = vsel %vm392, %v362, 0.0
      %397 = vadd.xlane.f32.xlu0 %v396
      %v398 = vpop.xlane.xlu0 %397
      %v399 = vadd.f32 %v395, 0.0
      %v400 = vadd.f32 %v398, 0.0
      %vm401 = vcmask 121856
      %v402 = vsel %vm401, %v390, 0.0
      %403 = vadd.xlane.f32.xlu0 %v402
      %v404 = vpop.xlane.xlu0 %403
      %v405 = vsel %vm401, %v391, 0.0
      %406 = vadd.xlane.f32.xlu0 %v405
      %v407 = vpop.xlane.xlu0 %406
      %v408 = vadd.f32 %v399, %v404
      %v409 = vadd.f32 %v400, %v407
      %v410 = vmul.f32 %v361, %v361
      %v411 = vmul.f32 %v362, %v362
      %v412 = vsel %vm392, %v410, 0.0
      %413 = vadd.xlane.f32.xlu0 %v412
      %v414 = vpop.xlane.xlu0 %413
      %v415 = vsel %vm392, %v411, 0.0
      %416 = vadd.xlane.f32.xlu0 %v415
      %v417 = vpop.xlane.xlu0 %416
      %v418 = vadd.f32 %v414, 0.0
      %v419 = vadd.f32 %v417, 0.0
      %v420 = vmul.f32 %v390, %v390
      %v421 = vmul.f32 %v391, %v391
      %v422 = vsel %vm401, %v420, 0.0
      %423 = vadd.xlane.f32.xlu0 %v422
      %v424 = vpop.xlane.xlu0 %423
      %v425 = vsel %vm401, %v421, 0.0
      %426 = vadd.xlane.f32.xlu0 %v425
      %v427 = vpop.xlane.xlu0 %426
      %v428 = vadd.f32 %v418, %v424
      %v429 = vadd.f32 %v419, %v427
      %vm430 = vcmask 7168
      %431 = vst.msk [vmem:[%s287] sm:$0xff] %vm430, %v408
      %432 = vst.msk [vmem:[%s287 + $0x8] sm:$0xff] %vm430, %v409
      %vm433 = vcmask 15368
      %434 = vst.msk [vmem:[%s287] sm:$0xff] %vm433, %v428
      %435 = vst.msk [vmem:[%s287 + $0x8] sm:$0xff] %vm433, %v429
      %p436 = scmp.lt.s32.totalorder %s17, 1
      %s437 = scalar_select %p436, %s17, 1
      %s438 = smul.addr %s437, 2
      %s439 = smul.addr %s438, 8
      %s440 = scalar_lea.vmem %s6, %s439
      // Predicated region
      $region45: #{uswd_fft_encoder.2} parent=43 // pred_check
        %p441 = pneg %p181
      $region46: #{uswd_fft_encoder.2} parent=43 // pred_check_branch
        %443 = sbr.rel (%p441) target = $region48
      $region47: #{uswd_fft_encoder.2} parent=43 // pred_region
        _
      $region48: #{uswd_fft_encoder.2} parent=43 // pred_fallthru
        _
    $region44: #{uswd_fft_encoder.2} parent=5 // pred_fallthru
      _
    %p444 = scmp.le.s32.totalorder 2, %s12
    // Predicated region
    $region49: #{uswd_fft_encoder.2} parent=5 // pred_check
      %p445 = pneg %p444
    $region50: #{uswd_fft_encoder.2} parent=5 // pred_check_branch
      %447 = sbr.rel (%p445) target = $region52
    $region51: #{uswd_fft_encoder.2} parent=5 // pred_region
      %s448 = ssub.s32 %s12, 2
      // Predicated region
      $region53: #{uswd_fft_encoder.2} parent=51 // pred_check
        %p449 = pneg %p187
      $region54: #{uswd_fft_encoder.2} parent=51 // pred_check_branch
        %451 = sbr.rel (%p449) target = $region56
      $region55: #{uswd_fft_encoder.2} parent=51 // pred_region
        %p452 = scmp.lt.s32.totalorder %s18, 1
        %s453 = scalar_select %p452, %s18, 1
        %s454 = smul.addr %s453, 2
        %s455 = smul.addr %s454, 8
        %s456 = scalar_lea.vmem %s6, %s455
      $region56: #{uswd_fft_encoder.2} parent=51 // pred_fallthru
        _
    $region52: #{uswd_fft_encoder.2} parent=5 // pred_fallthru
      _
  $region6: #{uswd_fft_encoder.2} parent=0 // loop_footer
    %s16 = sadd.s32 1, %s12
  $region7: #{uswd_fft_encoder.2} parent=0 // loop_footer_branch
    %11 = sbr.rel target = $region3
  $region8: #{uswd_fft_encoder.2} parent=0 // loop_exit
    _

// kernel: uswd_fft_encoder.3
$region0: #{uswd_fft_encoder.3}
  #allocation0 [shape = 'u32[]', space=smem, size = 0x4, offset = 0x4, fixed_abs, tag = 'smem constant byte address 0x4 - core index']
  #allocation1 [shape = 'u32[144,128]{1,0:T(1,128)}', space=vmem, size = 0x12000, scoped, tag = 'internal scratch']
  %s0 = inlined_call_operand.vmem [shape: f32[2,1,16], index: 0, kind: input, shape index: {}]
  %s1 = inlined_call_operand.vmem [shape: f32[2,1,16], index: 1, kind: input, shape index: {}]
  %s2 = inlined_call_operand.vmem [shape: f32[2,1,16], index: 2, kind: input, shape index: {}]
  %s3 = inlined_call_operand.vmem [shape: f32[2,1,16], index: 3, kind: input, shape index: {}]
  %s4 = inlined_call_operand.vmem [shape: f32[16,3], index: 4, kind: input, shape index: {}]
  %s5 = inlined_call_operand.vmem [shape: f32[16,1], index: 5, kind: input, shape index: {}]
  %s6 = inlined_call_operand.vmem [shape: f32[32,48], index: 6, kind: input, shape index: {}]
  %s7 = inlined_call_operand.vmem [shape: f32[32,1], index: 7, kind: input, shape index: {}]
  %s8 = inlined_call_operand.vmem [shape: f32[2,32,1], index: 8, kind: output, shape index: {}]
  %s9 = sld [smem:[#allocation0]]
  $region65: #{uswd_fft_encoder.3} parent=0
    _
  %s11 = ssub.s32 1, %s9
  %s12 = scalar_select 0, %s11, %s9
  loop: start=0, step=1, limit=4
  $region2: #{uswd_fft_encoder.3} parent=0 // loop_pre_header
    _
  $region3: #{uswd_fft_encoder.3} parent=0 // loop_header
    %s14 = sphi 0, %s18
    %p15 = scmp.ge.s32.totalorder %s14, 4
    %s24 = sphi 0, %s26
    %s27 = sphi 0, %s24
    %s28 = sphi 0, %s27
    %s44 = sphi 0, %s28
    %s50 = sphi 0, %s52
    %s53 = sphi 0, %s50
    %s54 = sphi 0, %s53
    %s70 = sphi 0, %s54
    %s76 = sphi 0, %s78
    %s79 = sphi 0, %s76
    %s80 = sphi 0, %s79
    %s96 = sphi 0, %s80
    %s102 = sphi 0, %s104
    %s105 = sphi 0, %s102
    %s106 = sphi 0, %s105
    %s122 = sphi 0, %s106
    %s126 = sphi 0, %s126
    %s128 = sphi 0, %s126
    %s129 = sphi 0, %s128
    %s143 = sphi 0, %s129
    %s147 = sphi 0, %s147
    %s149 = sphi 0, %s147
    %s150 = sphi 0, %s149
    %s164 = sphi 0, %s150
    %s168 = sphi 0, %s168
    %s170 = sphi 0, %s168
    %s171 = sphi 0, %s170
    %s185 = sphi 0, %s171
    %s189 = sphi 0, %s189
    %s191 = sphi 0, %s189
    %s192 = sphi 0, %s191
    %s206 = sphi 0, %s192
    %s212 = sphi 0, %s214
    %s215 = sphi 0, %s212
    %s216 = sphi 0, %s215
    %s232 = sphi 0, %s216
  $region4: #{uswd_fft_encoder.3} parent=0 // loop_header_branch
    %17 = sbr.rel (%p15) target = $region8
  $region5: #{uswd_fft_encoder.3} parent=0 // loop_body
    %s19 = ssub.s32 %s14, 1
    %s20 = ssub.s32 %s14, 2
    %s21 = sadd.s32 %s14, 1
    %s22 = ssub.s32 %s14, %s21
    %p23 = scmp.eq.s32.totalorder %s22, 0
    %s25 = sadd.s32 %s24, 1
    %s26 = scalar_select %p23, %s24, %s25
    %p29 = pneg %p23
    %p30 = scmp.eq.s32.totalorder %s14, 1
    %p31 = por %p29, %p30
    %p32 = scmp.ne.s32.totalorder %s24, %s27
    %p33 = scmp.eq.s32.totalorder %s14, 0
    %p34 = por %p32, %p33
    %p35 = scmp.ne.s32.totalorder %s24, %s27
    %p36 = scmp.eq.s32.totalorder %s19, 1
    %p37 = por %p35, %p36
    %p38 = scmp.ne.s32.totalorder %s27, %s28
    %p39 = scmp.eq.s32.totalorder %s19, 0
    %p40 = por %p38, %p39
    %p41 = scmp.ne.s32.totalorder %s27, %s28
    %p42 = scmp.eq.s32.totalorder %s20, 1
    %p43 = por %p41, %p42
    %p45 = scmp.ne.s32.totalorder %s28, %s44
    %p46 = scmp.eq.s32.totalorder %s20, 0
    %p47 = por %p45, %p46
    %s48 = ssub.s32 %s14, %s21
    %p49 = scmp.eq.s32.totalorder %s48, 0
    %s51 = sadd.s32 %s50, 1
    %s52 = scalar_select %p49, %s50, %s51
    %p55 = pneg %p49
    %p56 = scmp.eq.s32.totalorder %s14, 1
    %p57 = por %p55, %p56
    %p58 = scmp.ne.s32.totalorder %s50, %s53
    %p59 = scmp.eq.s32.totalorder %s14, 0
    %p60 = por %p58, %p59
    %p61 = scmp.ne.s32.totalorder %s50, %s53
    %p62 = scmp.eq.s32.totalorder %s19, 1
    %p63 = por %p61, %p62
    %p64 = scmp.ne.s32.totalorder %s53, %s54
    %p65 = scmp.eq.s32.totalorder %s19, 0
    %p66 = por %p64, %p65
    %p67 = scmp.ne.s32.totalorder %s53, %s54
    %p68 = scmp.eq.s32.totalorder %s20, 1
    %p69 = por %p67, %p68
    %p71 = scmp.ne.s32.totalorder %s54, %s70
    %p72 = scmp.eq.s32.totalorder %s20, 0
    %p73 = por %p71, %p72
    %s74 = ssub.s32 %s14, %s21
    %p75 = scmp.eq.s32.totalorder %s74, 0
    %s77 = sadd.s32 %s76, 1
    %s78 = scalar_select %p75, %s76, %s77
    %p81 = pneg %p75
    %p82 = scmp.eq.s32.totalorder %s14, 1
    %p83 = por %p81, %p82
    %p84 = scmp.ne.s32.totalorder %s76, %s79
    %p85 = scmp.eq.s32.totalorder %s14, 0
    %p86 = por %p84, %p85
    %p87 = scmp.ne.s32.totalorder %s76, %s79
    %p88 = scmp.eq.s32.totalorder %s19, 1
    %p89 = por %p87, %p88
    %p90 = scmp.ne.s32.totalorder %s79, %s80
    %p91 = scmp.eq.s32.totalorder %s19, 0
    %p92 = por %p90, %p91
    %p93 = scmp.ne.s32.totalorder %s79, %s80
    %p94 = scmp.eq.s32.totalorder %s20, 1
    %p95 = por %p93, %p94
    %p97 = scmp.ne.s32.totalorder %s80, %s96
    %p98 = scmp.eq.s32.totalorder %s20, 0
    %p99 = por %p97, %p98
    %s100 = ssub.s32 %s14, %s21
    %p101 = scmp.eq.s32.totalorder %s100, 0
    %s103 = sadd.s32 %s102, 1
    %s104 = scalar_select %p101, %s102, %s103
    %p107 = pneg %p101
    %p108 = scmp.eq.s32.totalorder %s14, 1
    %p109 = por %p107, %p108
    %p110 = scmp.ne.s32.totalorder %s102, %s105
    %p111 = scmp.eq.s32.totalorder %s14, 0
    %p112 = por %p110, %p111
    %p113 = scmp.ne.s32.totalorder %s102, %s105
    %p114 = scmp.eq.s32.totalorder %s19, 1
    %p115 = por %p113, %p114
    %p116 = scmp.ne.s32.totalorder %s105, %s106
    %p117 = scmp.eq.s32.totalorder %s19, 0
    %p118 = por %p116, %p117
    %p119 = scmp.ne.s32.totalorder %s105, %s106
    %p120 = scmp.eq.s32.totalorder %s20, 1
    %p121 = por %p119, %p120
    %p123 = scmp.ne.s32.totalorder %s106, %s122
    %p124 = scmp.eq.s32.totalorder %s20, 0
    %p125 = por %p123, %p124
    %s127 = sadd.s32 %s126, 1
    %p130 = scmp.eq.s32.totalorder %s14, 1
    %p131 = scmp.ne.s32.totalorder %s126, %s128
    %p132 = scmp.eq.s32.totalorder %s14, 0
    %p133 = por %p131, %p132
    %p134 = scmp.ne.s32.totalorder %s126, %s128
    %p135 = scmp.eq.s32.totalorder %s19, 1
    %p136 = por %p134, %p135
    %p137 = scmp.ne.s32.totalorder %s128, %s129
    %p138 = scmp.eq.s32.totalorder %s19, 0
    %p139 = por %p137, %p138
    %p140 = scmp.ne.s32.totalorder %s128, %s129
    %p141 = scmp.eq.s32.totalorder %s20, 1
    %p142 = por %p140, %p141
    %p144 = scmp.ne.s32.totalorder %s129, %s143
    %p145 = scmp.eq.s32.totalorder %s20, 0
    %p146 = por %p144, %p145
    %s148 = sadd.s32 %s147, 1
    %p151 = scmp.eq.s32.totalorder %s14, 1
    %p152 = scmp.ne.s32.totalorder %s147, %s149
    %p153 = scmp.eq.s32.totalorder %s14, 0
    %p154 = por %p152, %p153
    %p155 = scmp.ne.s32.totalorder %s147, %s149
    %p156 = scmp.eq.s32.totalorder %s19, 1
    %p157 = por %p155, %p156
    %p158 = scmp.ne.s32.totalorder %s149, %s150
    %p159 = scmp.eq.s32.totalorder %s19, 0
    %p160 = por %p158, %p159
    %p161 = scmp.ne.s32.totalorder %s149, %s150
    %p162 = scmp.eq.s32.totalorder %s20, 1
    %p163 = por %p161, %p162
    %p165 = scmp.ne.s32.totalorder %s150, %s164
    %p166 = scmp.eq.s32.totalorder %s20, 0
    %p167 = por %p165, %p166
    %s169 = sadd.s32 %s168, 1
    %p172 = scmp.eq.s32.totalorder %s14, 1
    %p173 = scmp.ne.s32.totalorder %s168, %s170
    %p174 = scmp.eq.s32.totalorder %s14, 0
    %p175 = por %p173, %p174
    %p176 = scmp.ne.s32.totalorder %s168, %s170
    %p177 = scmp.eq.s32.totalorder %s19, 1
    %p178 = por %p176, %p177
    %p179 = scmp.ne.s32.totalorder %s170, %s171
    %p180 = scmp.eq.s32.totalorder %s19, 0
    %p181 = por %p179, %p180
    %p182 = scmp.ne.s32.totalorder %s170, %s171
    %p183 = scmp.eq.s32.totalorder %s20, 1
    %p184 = por %p182, %p183
    %p186 = scmp.ne.s32.totalorder %s171, %s185
    %p187 = scmp.eq.s32.totalorder %s20, 0
    %p188 = por %p186, %p187
    %s190 = sadd.s32 %s189, 1
    %p193 = scmp.eq.s32.totalorder %s14, 1
    %p194 = scmp.ne.s32.totalorder %s189, %s191
    %p195 = scmp.eq.s32.totalorder %s14, 0
    %p196 = por %p194, %p195
    %p197 = scmp.ne.s32.totalorder %s189, %s191
    %p198 = scmp.eq.s32.totalorder %s19, 1
    %p199 = por %p197, %p198
    %p200 = scmp.ne.s32.totalorder %s191, %s192
    %p201 = scmp.eq.s32.totalorder %s19, 0
    %p202 = por %p200, %p201
    %p203 = scmp.ne.s32.totalorder %s191, %s192
    %p204 = scmp.eq.s32.totalorder %s20, 1
    %p205 = por %p203, %p204
    %p207 = scmp.ne.s32.totalorder %s192, %s206
    %p208 = scmp.eq.s32.totalorder %s20, 0
    %p209 = por %p207, %p208
    %s210 = ssub.s32 %s14, %s21
    %p211 = scmp.eq.s32.totalorder %s210, 0
    %s213 = sadd.s32 %s212, 1
    %s214 = scalar_select %p211, %s212, %s213
    %p217 = pneg %p211
    %p218 = scmp.eq.s32.totalorder %s14, 1
    %p219 = por %p217, %p218
    %p220 = scmp.ne.s32.totalorder %s212, %s215
    %p221 = scmp.eq.s32.totalorder %s14, 0
    %p222 = por %p220, %p221
    %p223 = scmp.ne.s32.totalorder %s212, %s215
    %p224 = scmp.eq.s32.totalorder %s19, 1
    %p225 = por %p223, %p224
    %p226 = scmp.ne.s32.totalorder %s215, %s216
    %p227 = scmp.eq.s32.totalorder %s19, 0
    %p228 = por %p226, %p227
    %p229 = scmp.ne.s32.totalorder %s215, %s216
    %p230 = scmp.eq.s32.totalorder %s20, 1
    %p231 = por %p229, %p230
    %p233 = scmp.ne.s32.totalorder %s216, %s232
    %p234 = scmp.eq.s32.totalorder %s20, 0
    %p235 = por %p233, %p234
    %p236 = scmp.le.s32.totalorder 1, %s14
    %p237 = scmp.lt.s32.totalorder %s14, 3
    %p238 = pnand %p236, %p237
    %p239 = pneg %p238
    // Predicated region
    $region9: #{uswd_fft_encoder.3} parent=5 // pred_check
      _
    $region10: #{uswd_fft_encoder.3} parent=5 // pred_check_branch
      %241 = sbr.rel (%p238) target = $region12
    $region11: #{uswd_fft_encoder.3} parent=5 // pred_region
      %s242 = ssub.s32 %s14, 1
      // Predicated region
      $region13: #{uswd_fft_encoder.3} parent=11 // pred_check
        %p243 = pneg %p139
      $region14: #{uswd_fft_encoder.3} parent=11 // pred_check_branch
        %245 = sbr.rel (%p243) target = $region16
      $region15: #{uswd_fft_encoder.3} parent=11 // pred_region
        _
      $region16: #{uswd_fft_encoder.3} parent=11 // pred_fallthru
        _
      // Predicated region
      $region17: #{uswd_fft_encoder.3} parent=11 // pred_check
        %p246 = pneg %p160
      $region18: #{uswd_fft_encoder.3} parent=11 // pred_check_branch
        %248 = sbr.rel (%p246) target = $region20
      $region19: #{uswd_fft_encoder.3} parent=11 // pred_region
        _
      $region20: #{uswd_fft_encoder.3} parent=11 // pred_fallthru
        _
      // Predicated region
      $region21: #{uswd_fft_encoder.3} parent=11 // pred_check
        %p249 = pneg %p181
      $region22: #{uswd_fft_encoder.3} parent=11 // pred_check_branch
        %251 = sbr.rel (%p249) target = $region24
      $region23: #{uswd_fft_encoder.3} parent=11 // pred_region
        _
      $region24: #{uswd_fft_encoder.3} parent=11 // pred_fallthru
        _
      // Predicated region
      $region25: #{uswd_fft_encoder.3} parent=11 // pred_check
        %p252 = pneg %p202
      $region26: #{uswd_fft_encoder.3} parent=11 // pred_check_branch
        %254 = sbr.rel (%p252) target = $region28
      $region27: #{uswd_fft_encoder.3} parent=11 // pred_region
        _
      $region28: #{uswd_fft_encoder.3} parent=11 // pred_fallthru
        _
    $region12: #{uswd_fft_encoder.3} parent=5 // pred_fallthru
      _
    %p255 = scmp.lt.s32.totalorder %s14, 2
    // Predicated region
    $region29: #{uswd_fft_encoder.3} parent=5 // pred_check
      %p256 = pneg %p255
    $region30: #{uswd_fft_encoder.3} parent=5 // pred_check_branch
      %258 = sbr.rel (%p256) target = $region32
    $region31: #{uswd_fft_encoder.3} parent=5 // pred_region
      // Predicated region
      $region33: #{uswd_fft_encoder.3} parent=31 // pred_check
        %p259 = pneg %p34
      $region34: #{uswd_fft_encoder.3} parent=31 // pred_check_branch
        %261 = sbr.rel (%p259) target = $region36
      $region35: #{uswd_fft_encoder.3} parent=31 // pred_region
        %p262 = scmp.lt.s32.totalorder %s14, 1
        %s263 = scalar_select %p262, %s14, 1
        %s264 = scalar_lea.vmem %s0, %s263
      $region36: #{uswd_fft_encoder.3} parent=31 // pred_fallthru
        _
      // Predicated region
      $region37: #{uswd_fft_encoder.3} parent=31 // pred_check
        %p265 = pneg %p60
      $region38: #{uswd_fft_encoder.3} parent=31 // pred_check_branch
        %267 = sbr.rel (%p265) target = $region40
      $region39: #{uswd_fft_encoder.3} parent=31 // pred_region
        %p268 = scmp.lt.s32.totalorder %s14, 1
        %s269 = scalar_select %p268, %s14, 1
        %s270 = scalar_lea.vmem %s1, %s269
      $region40: #{uswd_fft_encoder.3} parent=31 // pred_fallthru
        _
      // Predicated region
      $region41: #{uswd_fft_encoder.3} parent=31 // pred_check
        %p271 = pneg %p86
      $region42: #{uswd_fft_encoder.3} parent=31 // pred_check_branch
        %273 = sbr.rel (%p271) target = $region44
      $region43: #{uswd_fft_encoder.3} parent=31 // pred_region
        %p274 = scmp.lt.s32.totalorder %s14, 1
        %s275 = scalar_select %p274, %s14, 1
        %s276 = scalar_lea.vmem %s2, %s275
      $region44: #{uswd_fft_encoder.3} parent=31 // pred_fallthru
        _
      // Predicated region
      $region45: #{uswd_fft_encoder.3} parent=31 // pred_check
        %p277 = pneg %p112
      $region46: #{uswd_fft_encoder.3} parent=31 // pred_check_branch
        %279 = sbr.rel (%p277) target = $region48
      $region47: #{uswd_fft_encoder.3} parent=31 // pred_region
        %p280 = scmp.lt.s32.totalorder %s14, 1
        %s281 = scalar_select %p280, %s14, 1
        %s282 = scalar_lea.vmem %s3, %s281
      $region48: #{uswd_fft_encoder.3} parent=31 // pred_fallthru
        _
    $region32: #{uswd_fft_encoder.3} parent=5 // pred_fallthru
      _
    %p283 = scmp.le.s32.totalorder 1, %s14
    %p284 = scmp.lt.s32.totalorder %s14, 3
    %p285 = pnand %p283, %p284
    %p286 = pneg %p285
    // Predicated region
    $region49: #{uswd_fft_encoder.3} parent=5 // pred_check
      _
    $region50: #{uswd_fft_encoder.3} parent=5 // pred_check_branch
      %288 = sbr.rel (%p285) target = $region52
    $region51: #{uswd_fft_encoder.3} parent=5 // pred_region
      %s289 = ssub.s32 %s14, 1
      %p290 = scmp.lt.s32.totalorder %s19, 1
      %s291 = scalar_select %p290, %s19, 1
      %s292 = scalar_lea.vmem %s0, %s291
      %p293 = pneg %p40
      %p294 = pneg %p37
      %p295 = scmp.lt.s32.totalorder %s19, 1
      %s296 = scalar_select %p295, %s19, 1
      %s297 = scalar_lea.vmem %s1, %s296
      %p298 = pneg %p66
      %p299 = pneg %p63
      %p300 = scmp.lt.s32.totalorder %s19, 1
      %s301 = scalar_select %p300, %s19, 1
      %s302 = scalar_lea.vmem %s2, %s301
      %p303 = pneg %p92
      %p304 = pneg %p89
      %p305 = scmp.lt.s32.totalorder %s19, 1
      %s306 = scalar_select %p305, %s19, 1
      %s307 = scalar_lea.vmem %s3, %s306
      %p308 = pneg %p118
      %p309 = pneg %p115
      %p310 = pneg %p139
      %p311 = pneg %p136
      %p312 = pneg %p160
      %p313 = pneg %p157
      %p314 = pneg %p181
      %p315 = pneg %p178
      %p316 = pneg %p202
      %p317 = pneg %p199
      %p318 = pneg %p228
      %p319 = pneg %p225
      %p320 = scmp.lt.s32.totalorder %s19, 1
      %s321 = scalar_select %p320, %s19, 1
      %s322 = smul.addr %s321, 4
      %s323 = smul.addr %s322, 8
      %s324 = scalar_lea.vmem %s8, %s323
      %p325 = scmp.lt.s32.totalorder %s19, 1
      %s326 = scalar_select %p325, %s19, 1
      %s327 = scalar_lea.vmem %s0, %s326
      %p328 = scmp.lt.s32.totalorder %s19, 1
      %s329 = scalar_select %p328, %s19, 1
      %s330 = scalar_lea.vmem %s1, %s329
      %p331 = scmp.lt.s32.totalorder %s19, 1
      %s332 = scalar_select %p331, %s19, 1
      %s333 = scalar_lea.vmem %s2, %s332
      %p334 = scmp.lt.s32.totalorder %s19, 1
      %s335 = scalar_select %p334, %s19, 1
      %s336 = scalar_lea.vmem %s3, %s335
      %p337 = scmp.lt.s32.totalorder %s19, 1
      %s338 = scalar_select %p337, %s19, 1
      %s339 = smul.addr %s338, 4
      %s340 = smul.addr %s339, 8
      %s341 = scalar_lea.vmem %s8, %s340
      %v342 = vld [vmem:[%s4] sm:$0xff]
      %v343 = vld [vmem:[%s4 + $0x8] sm:$0xff]
      %v344 = vld [vmem:[%s5] sm:$0xff]
      %v345 = vld [vmem:[%s5 + $0x8] sm:$0xff]
      %v346 = vld [vmem:[%s6] sm:$0xff]
      %v347 = vld [vmem:[%s6 + $0x8] sm:$0xff]
      %v348 = vld [vmem:[%s6 + $0x10] sm:$0xff]
      %v349 = vld [vmem:[%s6 + $0x18] sm:$0xff]
      %v350 = vld [vmem:[%s7] sm:$0xff]
      %v351 = vld [vmem:[%s7 + $0x8] sm:$0xff]
      %v352 = vld [vmem:[%s7 + $0x10] sm:$0xff]
      %v353 = vld [vmem:[%s7 + $0x18] sm:$0xff]
      %v354 = vld [vmem:[%s327] sm:$0x1]
      %v355 = vld [vmem:[%s330] sm:$0x1]
      %v356 = vld [vmem:[%s333] sm:$0x1]
      %358 = vset.pattern.permute.xlu0 0
      %359 = vperm.xlu0 %358, %v342
      %v360 = vpop.permute.xlu0 %359
      %363 = vset.pattern.permute.xlu0 0
      %364 = vperm.xlu0 %363, %v343
      %v365 = vpop.permute.xlu0 %364
      %v368 = vlaneseq
      %v369 = vshrl.u32 %v368, 7
      %v370 = vsub.s32 0, %v369
      %v371 = vrot.slane %v354, %v370
      %v373 = vmul.f32 %v360, %v371
      %v374 = vmul.f32 %v365, %v371
      %375 = vset.pattern.permute.xlu0 1
      %376 = vperm.xlu0 %375, %v342
      %v377 = vpop.permute.xlu0 %376
      %379 = vset.pattern.permute.xlu0 1
      %380 = vperm.xlu0 %379, %v343
      %v381 = vpop.permute.xlu0 %380
      %v384 = vlaneseq
      %v385 = vshrl.u32 %v384, 7
      %v386 = vsub.s32 0, %v385
      %v387 = vrot.slane %v355, %v386
      %v389 = vmul.f32 %v377, %v387
      %v390 = vmul.f32 %v381, %v387
      %v391 = vadd.f32 %v373, %v389
      %v392 = vadd.f32 %v374, %v390
      %393 = vset.pattern.permute.xlu0 2
      %394 = vperm.xlu0 %393, %v342
      %v395 = vpop.permute.xlu0 %394
      %397 = vset.pattern.permute.xlu0 2
      %398 = vperm.xlu0 %397, %v343
      %v399 = vpop.permute.xlu0 %398
      %v402 = vlaneseq
      %v403 = vshrl.u32 %v402, 7
      %v404 = vsub.s32 0, %v403
      %v405 = vrot.slane %v356, %v404
      %v407 = vmul.f32 %v395, %v405
      %v408 = vmul.f32 %v399, %v405
      %v409 = vadd.f32 %v391, %v407
      %v410 = vadd.f32 %v392, %v408
      %412 = vset.pattern.permute.xlu0 0
      %413 = vperm.xlu0 %412, %v344
      %v414 = vpop.permute.xlu0 %413
      %417 = vset.pattern.permute.xlu0 0
      %418 = vperm.xlu0 %417, %v345
      %v419 = vpop.permute.xlu0 %418
      %v421 = vadd.f32 %v409, %v414
      %v422 = vadd.f32 %v410, %v419
      %v423 = vmax.f32 %v421, 0.0
      %v424 = vmax.f32 %v422, 0.0
      %v425 = vld [vmem:[%s336] sm:$0x1]
      %v426 = vmul.f32 %v360, %v405
      %v427 = vmul.f32 %v365, %v405
      %v429 = vlaneseq
      %v430 = vshrl.u32 %v429, 7
      %v431 = vsub.s32 0, %v430
      %v432 = vrot.slane %v425, %v431
      %v434 = vmul.f32 %v377, %v432
      %v435 = vmul.f32 %v381, %v432
      %v436 = vadd.f32 %v426, %v434
      %v437 = vadd.f32 %v427, %v435
      %v438 = vmul.f32 %v395, %v371
      %v439 = vmul.f32 %v399, %v371
      %442 = vrot.lane.b32.xlu0 %v438, 127
      %v443 = vpop.permute.xlu0 %442
      %444 = vrot.lane.b32.xlu0 %v439, 127
      %v445 = vpop.permute.xlu0 %444
      %v448 = vadd.f32 %v436, %v443
      %v449 = vadd.f32 %v437, %v445
      %v450 = vadd.f32 %v448, %v414
      %v451 = vadd.f32 %v449, %v419
      %v452 = vmax.f32 %v450, 0.0
      %v453 = vmax.f32 %v451, 0.0
      %456 = vrot.lane.b32.xlu0 %v423, 127
      %v457 = vpop.permute.xlu0 %456
      %458 = vrot.lane.b32.xlu0 %v424, 127
      %v459 = vpop.permute.xlu0 %458
      %463 = vset.pattern.permute.xlu0 0
      %464 = vperm.xlu0 %463, %v350
      %v465 = vpop.permute.xlu0 %464
      %468 = vset.pattern.permute.xlu0 0
      %469 = vperm.xlu0 %468, %v351
      %v470 = vpop.permute.xlu0 %469
      %473 = vset.pattern.permute.xlu0 0
      %474 = vperm.xlu0 %473, %v352
      %v475 = vpop.permute.xlu0 %474
      %478 = vset.pattern.permute.xlu0 0
      %479 = vperm.xlu0 %478, %v353
      %v480 = vpop.permute.xlu0 %479
      %vm482 = vcmask 392192
      %v484 = vsel %vm482, %v346, 0
      %v487 = vsel %vm482, %v347, 0
      %v490 = vsel %vm482, %v348, 0
      %v493 = vsel %vm482, %v349, 0
      %495 = vmatprep.subr.mxu0 0.0
      %496 = vmatpush1.msra.mxu0 %v423
      %497 = vmatprep.subr.mxu0 0.0
      %498 = vmatpush1.msra.mxu0 %v424
      %499 = vmatprep.subr.mxu0 0.0
      %500 = vmatpush1.msra.mxu0 %v452
      %501 = vmatprep.subr.mxu0 0.0
      %502 = vmatpush1.msra.mxu0 %v453
      %503 = vmatprep.subr.mxu0 0.0
      %504 = vmatpush1.msra.mxu0 %v457
      %505 = vmatprep.subr.mxu0 0.0
      %506 = vmatpush1.msra.mxu0 %v459
      %507 = vmatprep.subr.mxu0 0.0
      %508 = vmatpush1.msra.mxu0 0.0
      %509 = vmatprep.subr.mxu0 0.0
      %510 = vmatpush1.msra.mxu0 0.0
      %511 = vmatprep.subr.mxu0 0.0
      %512 = vmatpush1.msra.mxu0 0.0
      %513 = vmatprep.subr.mxu0 0.0
      %514 = vmatpush1.msra.mxu0 0.0
      %515 = vmatprep.subr.mxu0 0.0
      %516 = vmatpush1.msra.mxu0 0.0
      %517 = vmatprep.subr.mxu0 0.0
      %518 = vmatpush1.msra.mxu0 0.0
      %519 = vmatprep.subr.mxu0 0.0
      %520 = vmatpush1.msra.mxu0 0.0
      %521 = vmatprep.subr.mxu0 0.0
      %522 = vmatpush1.msra.mxu0 0.0
      %523 = vmatprep.subr.mxu0 0.0
      %524 = vmatpush1.msra.mxu0 0.0
      %525 = vmatprep.subr.mxu0 0.0
      %526 = vmatpush1.msra.mxu0 0.0
      %527 = vmatprep.subr.mxu0 0.0
      %528 = vmatpush1.msra.mxu0 0.0
      %529 = vmatprep.subr.mxu0 0.0
      %530 = vmatpush1.msra.mxu0 0.0
      %531 = vmatprep.subr.mxu0 0.0
      %532 = vmatpush1.msra.mxu0 0.0
      %533 = vmatprep.subr.mxu0 0.0
      %534 = vmatpush1.msra.mxu0 0.0
      %535 = vmatprep.subr.mxu0 0.0
      %536 = vmatpush1.msra.mxu0 0.0
      %537 = vmatprep.subr.mxu0 0.0
      %538 = vmatpush1.msra.mxu0 0.0
      %539 = vmatprep.subr.mxu0 0.0
      %540 = vmatpush1.msra.mxu0 0.0
      %541 = vmatprep.subr.mxu0 0.0
      %542 = vmatpush1.msra.mxu0 0.0
      %543 = vmatprep.subr.mxu0 0.0
      %544 = vmatpush1.msra.mxu0 0.0
      %545 = vmatprep.subr.mxu0 0.0
      %546 = vmatpush1.msra.mxu0 0.0
      %547 = vmatprep.subr.mxu0 0.0
      %548 = vmatpush1.msra.mxu0 0.0
      %549 = vmatprep.subr.mxu0 0.0
      %550 = vmatpush1.msra.mxu0 0.0
      %551 = vmatprep.subr.mxu0 0.0
      %552 = vmatpush1.msra.mxu0 0.0
      %553 = vmatprep.subr.mxu0 0.0
      %554 = vmatpush1.msra.mxu0 0.0
      %555 = vmatprep.subr.mxu0 0.0
      %556 = vmatpush1.msra.mxu0 0.0
      %557 = vmatprep.subr.mxu0 0.0
      %558 = vmatpush1.msra.mxu0 0.0
      %559 = vmatprep.mubr.f32.mxu0 0.0
      %560 = vmatmul.mubr.f32.gmra.mrb[0].mxu0 %v484
      %v561 = vpop.f32.mrb[0].mxu0
      %v562 = vadd.f32 %v465, %v561
      %v563 = vpop.f32.mrb[0].mxu0
      %564 = vmatprep.mubr.f32.mxu0 0.0
      %565 = vmatmul.mubr.f32.gmra.mrb[0].mxu0 %v487
      %v566 = vpop.f32.mrb[0].mxu0
      %v567 = vadd.f32 %v470, %v566
      %v568 = vpop.f32.mrb[0].mxu0
      %569 = vmatprep.mubr.f32.mxu0 0.0
      %570 = vmatmul.mubr.f32.gmra.mrb[0].mxu0 %v490
      %v571 = vpop.f32.mrb[0].mxu0
      %v572 = vadd.f32 %v475, %v571
      %v573 = vpop.f32.mrb[0].mxu0
      %574 = vmatprep.mubr.f32.mxu0 0.0
      %575 = vmatmul.mubr.f32.gmra.mrb[0].mxu0 %v493
      %v576 = vpop.f32.mrb[0].mxu0
      %v577 = vadd.f32 %v480, %v576
      %v578 = vpop.f32.mrb[0].mxu0
      %579 = vdwg.mxu0
      %v580 = vmax.f32 %v562, 0.0
      %v581 = vmax.f32 %v567, 0.0
      %v582 = vmax.f32 %v572, 0.0
      %v583 = vmax.f32 %v577, 0.0
      %vm584 = vcmask 121856
      %v585 = vsel %vm584, %v580, 0.0
      %586 = vadd.xlane.f32.xlu0 %v585
      %v587 = vpop.xlane.xlu0 %586
      %v588 = vsel %vm584, %v581, 0.0
      %589 = vadd.xlane.f32.xlu0 %v588
      %v590 = vpop.xlane.xlu0 %589
      %v591 = vsel %vm584, %v582, 0.0
      %592 = vadd.xlane.f32.xlu0 %v591
      %v593 = vpop.xlane.xlu0 %592
      %v594 = vsel %vm584, %v583, 0.0
      %595 = vadd.xlane.f32.xlu0 %v594
      %v596 = vpop.xlane.xlu0 %595
      %v597 = vmul.f32 %v587, 0.06666667
      %v598 = vmul.f32 %v590, 0.06666667
      %v599 = vmul.f32 %v593, 0.06666667
      %v600 = vmul.f32 %v596, 0.06666667
      %vm601 = vcmask 7168
      %602 = vst.msk [vmem:[%s341] sm:$0xff] %vm601, %v597
      %603 = vst.msk [vmem:[%s341 + $0x8] sm:$0xff] %vm601, %v598
      %604 = vst.msk [vmem:[%s341 + $0x10] sm:$0xff] %vm601, %v599
      %605 = vst.msk [vmem:[%s341 + $0x18] sm:$0xff] %vm601, %v600
      %p606 = scmp.lt.s32.totalorder %s19, 1
      %s607 = scalar_select %p606, %s19, 1
      %s608 = smul.addr %s607, 4
      %s609 = smul.addr %s608, 8
      %s610 = scalar_lea.vmem %s8, %s609
      // Predicated region
      $region53: #{uswd_fft_encoder.3} parent=51 // pred_check
        %p611 = pneg %p225
      $region54: #{uswd_fft_encoder.3} parent=51 // pred_check_branch
        %613 = sbr.rel (%p611) target = $region56
      $region55: #{uswd_fft_encoder.3} parent=51 // pred_region
        _
      $region56: #{uswd_fft_encoder.3} parent=51 // pred_fallthru
        _
    $region52: #{uswd_fft_encoder.3} parent=5 // pred_fallthru
      _
    %p614 = scmp.le.s32.totalorder 2, %s14
    // Predicated region
    $region57: #{uswd_fft_encoder.3} parent=5 // pred_check
      %p615 = pneg %p614
    $region58: #{uswd_fft_encoder.3} parent=5 // pred_check_branch
      %617 = sbr.rel (%p615) target = $region60
    $region59: #{uswd_fft_encoder.3} parent=5 // pred_region
      %s618 = ssub.s32 %s14, 2
      // Predicated region
      $region61: #{uswd_fft_encoder.3} parent=59 // pred_check
        %p619 = pneg %p231
      $region62: #{uswd_fft_encoder.3} parent=59 // pred_check_branch
        %621 = sbr.rel (%p619) target = $region64
      $region63: #{uswd_fft_encoder.3} parent=59 // pred_region
        %p622 = scmp.lt.s32.totalorder %s20, 1
        %s623 = scalar_select %p622, %s20, 1
        %s624 = smul.addr %s623, 4
        %s625 = smul.addr %s624, 8
        %s626 = scalar_lea.vmem %s8, %s625
      $region64: #{uswd_fft_encoder.3} parent=59 // pred_fallthru
        _
    $region60: #{uswd_fft_encoder.3} parent=5 // pred_fallthru
      _
  $region6: #{uswd_fft_encoder.3} parent=0 // loop_footer
    %s18 = sadd.s32 1, %s14
  $region7: #{uswd_fft_encoder.3} parent=0 // loop_footer_branch
    %13 = sbr.rel target = $region3
  $region8: #{uswd_fft_encoder.3} parent=0 // loop_exit
    _

</llo_original>
